<compile_context>
chip_gen: v7x
topology: tpu7x:2x2x1
jax: 0.10.0
libtpu: 0.0.40
codegen_flags: <defaults>
</compile_context>

<pallas_src>
import functools

import jax
import jax.numpy as jnp
from jax.experimental import pallas as pl
from jax.experimental.pallas import tpu as pltpu


def _round_up(v, m):
    return (v + m - 1) // m * m


def _cdiv(a, b):
    return -(-a // b)


# --------------------------------------------------------------------------
# Kernel
# --------------------------------------------------------------------------
def _gru_gate_kernel(x_ref, y_ref, wcat_ref, ucat_ref, ug_ref, o_ref, *,
                     bg, c, cp, nb):
    """One (nb, C, tl) tile of the GRU gate.

    x_ref / y_ref / o_ref : (nb, C, tl)     lanes = spatial positions
    wcat_ref : (3*cp, C)   rows = [Wr; Wz; Wg], each group zero-padded to cp rows
    ucat_ref : (2*cp, C)   rows = [Ur; Uz]
    ug_ref   : (C, C)
    """
    wcat = wcat_ref[...]
    ucat = ucat_ref[...]
    ug = ug_ref[...]
    mm_dtype = wcat.dtype            # matmul operand dtype (f32 or bf16)

    for b in range(nb):              # small static unroll over the batch sub-block
        x = x_ref[b]
        y = y_ref[b]
        xf = x.astype(jnp.float32)   # elementwise tail stays f32 (v5e-safe)
        xm = x.astype(mm_dtype)
        ym = y.astype(mm_dtype)

        # Three MXU pushes instead of six (f32 accumulation).
        wy = jnp.dot(wcat, ym, preferred_element_type=jnp.float32)   # (3cp, tl)
        ux = jnp.dot(ucat, xm, preferred_element_type=jnp.float32)   # (2cp, tl)

        # cp is 8-aligned, so these row slices start on sublane boundaries:
        # no realignment copies even when C % 8 != 0.
        r = jax.nn.sigmoid(wy[:c] + ux[:c])                               # reset
        z = jax.nn.sigmoid(wy[cp:cp + c] + ux[cp:cp + c] - bg)            # update
        rx = (r * xf).astype(mm_dtype)
        h = jnp.tanh(wy[2 * cp:2 * cp + c]
                     + jnp.dot(ug, rx, preferred_element_type=jnp.float32))
        # (1 - z) * x + z * h  ==  x + z * (h - x)
        g = xf + z * (h - xf)
        o_ref[b] = g.astype(o_ref.dtype)


# --------------------------------------------------------------------------
# Parameter preparation (once per model)
# --------------------------------------------------------------------------
def prepare_gru_gate_params(w, matmul_dtype=None):
    """Concatenate / pad / (optionally) pre-cast the 1x1-conv weights once.

    `w` is a dict of (C_out, C_in) matrices (PyTorch conv weight with the
    trailing 1x1 squeezed): Wr, Ur, Wz, Uz, Wg, Ug.
    `matmul_dtype=jnp.bfloat16` shrinks MXU operands on all generations
    (v5e's MXU is bf16-native too); accumulation and the tail stay f32.
    """
    c = int(w["Wr"].shape[0])
    cp = _round_up(c, 8)             # 8-aligned group stride for the row slices

    def prep(m):
        m = jnp.asarray(m)
        if matmul_dtype is not None:
            m = m.astype(matmul_dtype)
        if cp != c:
            m = jnp.concatenate(
                [m, jnp.zeros((cp - c, m.shape[1]), m.dtype)], axis=0)
        return m

    wcat = jnp.concatenate([prep(w["Wr"]), prep(w["Wz"]), prep(w["Wg"])], axis=0)
    ucat = jnp.concatenate([prep(w["Ur"]), prep(w["Uz"])], axis=0)
    ug = jnp.asarray(w["Ug"])
    if matmul_dtype is not None:
        ug = ug.astype(matmul_dtype)
    return {"Wcat": wcat, "Ucat": ucat, "Ug": ug, "group_stride": cp}


# --------------------------------------------------------------------------
# Generation-aware sizing
# --------------------------------------------------------------------------
def _vmem_budget():
    """Returns (tile budget bytes, vmem_limit cap bytes, per-step byte target)."""
    try:
        cap = int(pltpu.get_tpu_info().vmem_capacity_bytes)
    except Exception:
        cap = 64 << 20               # conservative (v7x-sized) fallback
    if cap >= (96 << 20):            # v5e / v6e: 128 MiB physical VMEM
        return 88 << 20, 108 << 20, 2 << 20
    # v7x: 64 MiB physical VMEM, ~3.2 TB/s HBM -> larger per-step bytes.
    return 44 << 20, 50 << 20, 3 << 20


def _pick_tiles(n, c, cp, hw, in_bytes, out_bytes, w_bytes, budget, step_target):
    """Pick (batch sub-block Nb, lane tile tl, estimated VMEM need)."""
    # Weights counted double-buffered (conservative; Buffered(1) may halve it).
    weight_bytes = 2 * ((3 * cp + 2 * cp) * c + c * c) * w_bytes

    def need_bytes(nb, tl):
        blocks = 2 * nb * c * tl * (2 * in_bytes + out_bytes)   # x,y,out double-buffered
        temps = (5 * cp + 10 * c) * tl * 4                      # in-kernel f32 temporaries
        return weight_bytes + blocks + temps

    def fits(nb, tl):
        return need_bytes(nb, tl) <= budget

    # ---- lane tile ------------------------------------------------------
    if hw % 128 == 0:
        tl = 128                      # smallest legal tile; grow while it fits
        t = 256
        while t <= hw:
            if fits(1, t):
                tl = t
            else:
                break
            t += 128
    elif hw < 128 or fits(1, hw):
        tl = hw                       # full row (full-extent block is always legal)
    else:
        tl = max(128, (min(hw, 4096) // 128) * 128)
        while tl > 128 and not fits(1, tl):
            tl -= 128
        # Trailing lane block may read out-of-bounds lanes; those results are
        # discarded by masked writes (contraction is over C only).

    # ---- batch sub-block: size grid steps by bytes moved, not lane count --
    def traffic(nb):
        return nb * c * tl * (2 * in_bytes + out_bytes)

    nb = 1
    while nb < min(n, 8) and traffic(nb) < step_target and fits(nb + 1, tl):
        nb += 1

    # ---- guarantee >= 2 grid steps (v7x has 2 TensorCores) ----------------
    def steps(nb_, tl_):
        return _cdiv(n, nb_) * _cdiv(hw, tl_)

    while steps(nb, tl) < 2:
        if nb > 1:
            nb -= 1
        elif tl > 128:
            half = max(128, _round_up(max(tl // 2, 128), 128))
            if half >= tl:
                break
            tl = half
        else:
            break

    return nb, tl, need_bytes(nb, tl)


# --------------------------------------------------------------------------
# Wrapper
# --------------------------------------------------------------------------
def gru_gate_pallas(x_nchw, y_nchw, params, *, bg=0.1):
    """GRUGate forward.  `params` from prepare_gru_gate_params().

    Output dtype follows x's dtype, so bf16 x/y give bf16 output (halving HBM
    traffic for this memory-bound op).
    """
    N, C, H, W = x_nchw.shape
    HW = H * W

    # Free reshape: NCHW -> (N, C, H*W).  No transpose, no pad.
    x3 = x_nchw.reshape(N, C, HW)
    y3 = y_nchw.reshape(N, C, HW)

    wcat, ucat, ug = params["Wcat"], params["Ucat"], params["Ug"]
    Cp = int(params["group_stride"])

    budget, limit_cap, step_target = _vmem_budget()
    in_bytes = x3.dtype.itemsize
    out_bytes = x3.dtype.itemsize
    w_bytes = wcat.dtype.itemsize
    Nb, tl, need = _pick_tiles(N, C, Cp, HW, in_bytes, out_bytes, w_bytes,
                               budget, step_target)

    vmem_limit = int(min(max(need + (8 << 20), 32 << 20), limit_cap))

    kernel = functools.partial(_gru_gate_kernel, bg=float(bg), c=C, cp=Cp, nb=Nb)
    grid = (pl.cdiv(N, Nb), pl.cdiv(HW, tl))
    row_spec = pl.BlockSpec((Nb, C, tl), lambda n, l: (n, 0, l))

    def build(weight_pipeline_mode):
        wkw = {}
        if weight_pipeline_mode is not None:
            wkw = {"pipeline_mode": weight_pipeline_mode}
        w_specs = [
            pl.BlockSpec(wcat.shape, lambda n, l: (0, 0), **wkw),   # [Wr;Wz;Wg]
            pl.BlockSpec(ucat.shape, lambda n, l: (0, 0), **wkw),   # [Ur;Uz]
            pl.BlockSpec(ug.shape, lambda n, l: (0, 0), **wkw),     # Ug
        ]
        return pl.pallas_call(
            kernel,
            out_shape=jax.ShapeDtypeStruct((N, C, HW), x_nchw.dtype),
            grid_spec=pltpu.PrefetchScalarGridSpec(
                num_scalar_prefetch=0,
                grid=grid,
                in_specs=[row_spec, row_spec] + w_specs,
                out_specs=row_spec,
            ),
            compiler_params=pltpu.CompilerParams(
                dimension_semantics=("parallel", "parallel"),
                vmem_limit_bytes=vmem_limit),
        )

    try:
        # Grid-invariant weights: single-buffer them (saves 6*C^2*w_bytes VMEM).
        out = build(pl.Buffered(1))(x3, y3, wcat, ucat, ug)
    except Exception:
        # Fallback for JAX versions that reject Buffered(1) weight specs.
        out = build(None)(x3, y3, wcat, ucat, ug)

    return out.reshape(N, C, H, W)


# --------------------------------------------------------------------------
# Reference + test
# --------------------------------------------------------------------------
def _xavier_uniform_conv1x1(key, c):
    # Conv2d(c, c, kernel_size=1): fan_in = fan_out = c, gain = 1.
    bound = (6.0 / (c + c)) ** 0.5
    return jax.random.uniform(key, (c, c), jnp.float32, -bound, bound)  # (C_out, C_in)


def _ref_gru_gate(x, y, w, bg, matmul_dtype=None):
    """Pure-JAX NCHW reference (1x1 conv == per-pixel channel matmul)."""
    def conv(W, t):
        W = jnp.asarray(W)
        if matmul_dtype is not None:
            W = W.astype(matmul_dtype)
            t = t.astype(matmul_dtype)
        return jnp.einsum("oc,nchw->nohw", W, t,
                          preferred_element_type=jnp.float32)

    xf = x.astype(jnp.float32)
    r = jax.nn.sigmoid(conv(w["Wr"], y) + conv(w["Ur"], x))
    z = jax.nn.sigmoid(conv(w["Wz"], y) + conv(w["Uz"], x) - bg)
    h = jnp.tanh(conv(w["Wg"], y) + conv(w["Ug"], r * xf))
    g = xf + z * (h - xf)
    return g.astype(x.dtype)


if __name__ == "__main__":
    root = jax.random.PRNGKey(0)
    key_a, key_b = jax.random.split(root)
    names = ["Wr", "Ur", "Wz", "Uz", "Wg", "Ug"]
    bg = 0.1

    def make_case(key, n, c, h, w):
        ks = jax.random.split(key, 8)
        x = jax.random.normal(ks[0], (n, c, h, w), jnp.float32)
        y = jax.random.normal(ks[1], (n, c, h, w), jnp.float32)
        wts = {nm: _xavier_uniform_conv1x1(k, c) for nm, k in zip(names, ks[2:])}
        return x, y, wts

    # Case 1: small NCHW, f32 everything (C=4 exercises the 8-row group pad).
    x, y, wts = make_case(key_a, 2, 4, 16, 16)
    params = prepare_gru_gate_params(wts)
    g = jax.block_until_ready(gru_gate_pallas(x, y, params, bg=bg))
    g_ref = _ref_gru_gate(x, y, wts, bg)
    assert g.shape == x.shape and g.dtype == x.dtype
    err = float(jnp.max(jnp.abs(g - g_ref)))
    assert err < 1e-4, f"f32 case err={err}"

    # Case 2: bf16 at the HBM boundary (x/y/out) + bf16 MXU operands.
    xb = x.astype(jnp.bfloat16)
    yb = y.astype(jnp.bfloat16)
    params_bf = prepare_gru_gate_params(wts, matmul_dtype=jnp.bfloat16)
    gb = jax.block_until_ready(gru_gate_pallas(xb, yb, params_bf, bg=bg))
    gb_ref = _ref_gru_gate(xb, yb, wts, bg, matmul_dtype=jnp.bfloat16)
    assert gb.dtype == jnp.bfloat16
    err_b = float(jnp.max(jnp.abs(gb.astype(jnp.float32) - gb_ref.astype(jnp.float32))))
    assert err_b < 6e-2, f"bf16 case err={err_b}"

    # Case 3: C > 8 with C % 8 != 0, spatial extent < 128 (full-row lane tile),
    # N not divisible by the batch sub-block (exercises partial trailing block).
    x2, y2, wts2 = make_case(key_b, 3, 12, 7, 9)
    params2 = prepare_gru_gate_params(wts2)
    g2 = jax.block_until_ready(gru_gate_pallas(x2, y2, params2, bg=bg))
    g2_ref = _ref_gru_gate(x2, y2, wts2, bg)
    err2 = float(jnp.max(jnp.abs(g2 - g2_ref)))
    assert err2 < 1e-4, f"odd-shape case err={err2}"

    print("KERNEL_OK")
</pallas_src>

<mosaic_0001>
module attributes {stable_mosaic.version = 11 : i64} {
  func.func @_gru_gate_kernel(%arg0: i32, %arg1: i32, %arg2: memref<1x4x256xf32, #tpu.memory_space<vmem>>, %arg3: memref<1x4x256xf32, #tpu.memory_space<vmem>>, %arg4: memref<24x4xf32, #tpu.memory_space<vmem>>, %arg5: memref<16x4xf32, #tpu.memory_space<vmem>>, %arg6: memref<4x4xf32, #tpu.memory_space<vmem>>, %arg7: memref<1x4x256xf32, #tpu.memory_space<vmem>>) attributes {dimension_semantics = [#tpu.dimension_semantics<parallel>, #tpu.dimension_semantics<parallel>], iteration_bounds = array<i64: 2, 1>, scalar_prefetch = 0 : i64, scratch_operands = 0 : i64, tpu.core_type = #tpu.core_type<tc>, window_params = [{transform_indices = @transform_0, window_bounds = array<i64: 1, 4, 256>}, {transform_indices = @transform_1, window_bounds = array<i64: 1, 4, 256>}, {pipeline_mode = #tpu.pipeline_mode<synchronous>, transform_indices = @transform_2, window_bounds = array<i64: 24, 4>}, {pipeline_mode = #tpu.pipeline_mode<synchronous>, transform_indices = @transform_3, window_bounds = array<i64: 16, 4>}, {pipeline_mode = #tpu.pipeline_mode<synchronous>, transform_indices = @transform_4, window_bounds = array<i64: 4, 4>}, {transform_indices = @transform_5, window_bounds = array<i64: 1, 4, 256>}]} {
    %c0 = arith.constant 0 : index
    %c0_0 = arith.constant 0 : index
    %0 = vector.load %arg4[%c0, %c0_0] : memref<24x4xf32, #tpu.memory_space<vmem>>, vector<24x4xf32>
    %c0_1 = arith.constant 0 : index
    %c0_2 = arith.constant 0 : index
    %1 = vector.load %arg5[%c0_1, %c0_2] : memref<16x4xf32, #tpu.memory_space<vmem>>, vector<16x4xf32>
    %c0_3 = arith.constant 0 : index
    %c0_4 = arith.constant 0 : index
    %2 = vector.load %arg6[%c0_3, %c0_4] : memref<4x4xf32, #tpu.memory_space<vmem>>, vector<4x4xf32>
    %c0_5 = arith.constant 0 : index
    %c0_6 = arith.constant 0 : index
    %c0_7 = arith.constant 0 : index
    %3 = vector.load %arg2[%c0_5, %c0_6, %c0_7] : memref<1x4x256xf32, #tpu.memory_space<vmem>>, vector<1x4x256xf32>
    %4 = vector.shape_cast %3 : vector<1x4x256xf32> to vector<4x256xf32>
    %c0_8 = arith.constant 0 : index
    %c0_9 = arith.constant 0 : index
    %c0_10 = arith.constant 0 : index
    %5 = vector.load %arg3[%c0_8, %c0_9, %c0_10] : memref<1x4x256xf32, #tpu.memory_space<vmem>>, vector<1x4x256xf32>
    %6 = vector.shape_cast %5 : vector<1x4x256xf32> to vector<4x256xf32>
    %cst = arith.constant dense<0.000000e+00> : vector<24x256xf32>
    %7 = tpu.matmul %0, %6, %cst {dimension_numbers = #tpu.dot_dimension_numbers<[1], [0], [0], [1], [0, 0, 1, 1], [], []>} : vector<24x4xf32>, vector<4x256xf32>, vector<24x256xf32> -> vector<24x256xf32>
    %cst_11 = arith.constant dense<0.000000e+00> : vector<16x256xf32>
    %8 = tpu.matmul %1, %4, %cst_11 {dimension_numbers = #tpu.dot_dimension_numbers<[1], [0], [0], [1], [0, 0, 1, 1], [], []>} : vector<16x4xf32>, vector<4x256xf32>, vector<16x256xf32> -> vector<16x256xf32>
    %9 = vector.extract_strided_slice %7 {offsets = [0, 0], sizes = [4, 256], strides = [1, 1]} : vector<24x256xf32> to vector<4x256xf32>
    %10 = vector.extract_strided_slice %8 {offsets = [0, 0], sizes = [4, 256], strides = [1, 1]} : vector<16x256xf32> to vector<4x256xf32>
    %11 = arith.addf %9, %10 : vector<4x256xf32>
    %12 = arith.negf %11 : vector<4x256xf32>
    %13 = math.exp %12 : vector<4x256xf32>
    %cst_12 = arith.constant 1.000000e+00 : f32
    %14 = vector.broadcast %cst_12 : f32 to vector<4x256xf32>
    %15 = arith.addf %14, %13 : vector<4x256xf32>
    %16 = arith.divf %14, %15 : vector<4x256xf32>
    %17 = vector.extract_strided_slice %7 {offsets = [8, 0], sizes = [4, 256], strides = [1, 1]} : vector<24x256xf32> to vector<4x256xf32>
    %18 = vector.extract_strided_slice %8 {offsets = [8, 0], sizes = [4, 256], strides = [1, 1]} : vector<16x256xf32> to vector<4x256xf32>
    %19 = arith.addf %17, %18 : vector<4x256xf32>
    %cst_13 = arith.constant 1.000000e-01 : f32
    %20 = vector.broadcast %cst_13 : f32 to vector<4x256xf32>
    %21 = arith.subf %19, %20 : vector<4x256xf32>
    %22 = arith.negf %21 : vector<4x256xf32>
    %23 = math.exp %22 : vector<4x256xf32>
    %cst_14 = arith.constant 1.000000e+00 : f32
    %24 = vector.broadcast %cst_14 : f32 to vector<4x256xf32>
    %25 = arith.addf %24, %23 : vector<4x256xf32>
    %26 = arith.divf %24, %25 : vector<4x256xf32>
    %27 = arith.mulf %16, %4 : vector<4x256xf32>
    %28 = vector.extract_strided_slice %7 {offsets = [16, 0], sizes = [4, 256], strides = [1, 1]} : vector<24x256xf32> to vector<4x256xf32>
    %cst_15 = arith.constant dense<0.000000e+00> : vector<4x256xf32>
    %29 = tpu.matmul %2, %27, %cst_15 {dimension_numbers = #tpu.dot_dimension_numbers<[1], [0], [0], [1], [0, 0, 1, 1], [], []>} : vector<4x4xf32>, vector<4x256xf32>, vector<4x256xf32> -> vector<4x256xf32>
    %30 = arith.addf %28, %29 : vector<4x256xf32>
    %31 = math.tanh %30 : vector<4x256xf32>
    %32 = arith.subf %31, %4 : vector<4x256xf32>
    %33 = arith.mulf %26, %32 : vector<4x256xf32>
    %34 = arith.addf %4, %33 : vector<4x256xf32>
    %c0_16 = arith.constant 0 : index
    %c0_17 = arith.constant 0 : index
    %c0_18 = arith.constant 0 : index
    %35 = vector.load %arg7[%c0_16, %c0_17, %c0_18] : memref<1x4x256xf32, #tpu.memory_space<vmem>>, vector<1x4x256xf32>
    %36 = vector.shape_cast %35 : vector<1x4x256xf32> to vector<4x256xf32>
    %37 = vector.shape_cast %34 : vector<4x256xf32> to vector<1x4x256xf32>
    tpu.vector_store %arg7[%c0_16, %c0_17, %c0_18], %37 {strides = array<i32>} : memref<1x4x256xf32, #tpu.memory_space<vmem>>, vector<1x4x256xf32>,
    return
  }
  func.func @transform_0(%arg0: i32, %arg1: i32) -> (i32, i32, i32) {
    %c0_i32 = arith.constant 0 : i32
    %c0_i32_0 = arith.constant 0 : i32
    return %arg0, %c0_i32, %arg1 : i32, i32, i32
  }
  func.func @transform_1(%arg0: i32, %arg1: i32) -> (i32, i32, i32) {
    %c0_i32 = arith.constant 0 : i32
    %c0_i32_0 = arith.constant 0 : i32
    return %arg0, %c0_i32, %arg1 : i32, i32, i32
  }
  func.func @transform_2(%arg0: i32, %arg1: i32) -> (i32, i32) {
    %c0_i32 = arith.constant 0 : i32
    %c0_i32_0 = arith.constant 0 : i32
    %c0_i32_1 = arith.constant 0 : i32
    return %c0_i32, %c0_i32_0 : i32, i32
  }
  func.func @transform_3(%arg0: i32, %arg1: i32) -> (i32, i32) {
    %c0_i32 = arith.constant 0 : i32
    %c0_i32_0 = arith.constant 0 : i32
    %c0_i32_1 = arith.constant 0 : i32
    return %c0_i32, %c0_i32_0 : i32, i32
  }
  func.func @transform_4(%arg0: i32, %arg1: i32) -> (i32, i32) {
    %c0_i32 = arith.constant 0 : i32
    %c0_i32_0 = arith.constant 0 : i32
    %c0_i32_1 = arith.constant 0 : i32
    return %c0_i32, %c0_i32_0 : i32, i32
  }
  func.func @transform_5(%arg0: i32, %arg1: i32) -> (i32, i32, i32) {
    %c0_i32 = arith.constant 0 : i32
    %c0_i32_0 = arith.constant 0 : i32
    return %arg0, %c0_i32, %arg1 : i32, i32, i32
  }
}

module attributes {stable_mosaic.version = 11 : i64} {
  func.func @_gru_gate_kernel(%arg0: i32, %arg1: i32, %arg2: memref<1x4x256xf32, #tpu.memory_space<vmem>>, %arg3: memref<1x4x256xf32, #tpu.memory_space<vmem>>, %arg4: memref<24x4xf32, #tpu.memory_space<vmem>>, %arg5: memref<16x4xf32, #tpu.memory_space<vmem>>, %arg6: memref<4x4xf32, #tpu.memory_space<vmem>>, %arg7: memref<1x4x256xf32, #tpu.memory_space<vmem>>) attributes {dimension_semantics = [#tpu.dimension_semantics<parallel>, #tpu.dimension_semantics<parallel>], iteration_bounds = array<i64: 2, 1>, scalar_prefetch = 0 : i64, scratch_operands = 0 : i64, tpu.core_type = #tpu.core_type<tc>, window_params = [{transform_indices = @transform_0, window_bounds = array<i64: 1, 4, 256>}, {transform_indices = @transform_1, window_bounds = array<i64: 1, 4, 256>}, {pipeline_mode = #tpu.pipeline_mode<synchronous>, transform_indices = @transform_2, window_bounds = array<i64: 24, 4>}, {pipeline_mode = #tpu.pipeline_mode<synchronous>, transform_indices = @transform_3, window_bounds = array<i64: 16, 4>}, {pipeline_mode = #tpu.pipeline_mode<synchronous>, transform_indices = @transform_4, window_bounds = array<i64: 4, 4>}, {transform_indices = @transform_5, window_bounds = array<i64: 1, 4, 256>}]} {
    %c0 = arith.constant 0 : index
    %c0_0 = arith.constant 0 : index
    %0 = vector.load %arg4[%c0, %c0_0] : memref<24x4xf32, #tpu.memory_space<vmem>>, vector<24x4xf32>
    %c0_1 = arith.constant 0 : index
    %c0_2 = arith.constant 0 : index
    %1 = vector.load %arg5[%c0_1, %c0_2] : memref<16x4xf32, #tpu.memory_space<vmem>>, vector<16x4xf32>
    %c0_3 = arith.constant 0 : index
    %c0_4 = arith.constant 0 : index
    %2 = vector.load %arg6[%c0_3, %c0_4] : memref<4x4xf32, #tpu.memory_space<vmem>>, vector<4x4xf32>
    %c0_5 = arith.constant 0 : index
    %c0_6 = arith.constant 0 : index
    %c0_7 = arith.constant 0 : index
    %3 = vector.load %arg2[%c0_5, %c0_6, %c0_7] : memref<1x4x256xf32, #tpu.memory_space<vmem>>, vector<1x4x256xf32>
    %4 = vector.shape_cast %3 : vector<1x4x256xf32> to vector<4x256xf32>
    %c0_8 = arith.constant 0 : index
    %c0_9 = arith.constant 0 : index
    %c0_10 = arith.constant 0 : index
    %5 = vector.load %arg3[%c0_8, %c0_9, %c0_10] : memref<1x4x256xf32, #tpu.memory_space<vmem>>, vector<1x4x256xf32>
    %6 = vector.shape_cast %5 : vector<1x4x256xf32> to vector<4x256xf32>
    %cst = arith.constant dense<0.000000e+00> : vector<24x256xf32>
    %7 = tpu.matmul %0, %6, %cst {dimension_numbers = #tpu.dot_dimension_numbers<[1], [0], [0], [1], [0, 0, 1, 1], [], []>} : vector<24x4xf32>, vector<4x256xf32>, vector<24x256xf32> -> vector<24x256xf32>
    %cst_11 = arith.constant dense<0.000000e+00> : vector<16x256xf32>
    %8 = tpu.matmul %1, %4, %cst_11 {dimension_numbers = #tpu.dot_dimension_numbers<[1], [0], [0], [1], [0, 0, 1, 1], [], []>} : vector<16x4xf32>, vector<4x256xf32>, vector<16x256xf32> -> vector<16x256xf32>
    %9 = vector.extract_strided_slice %7 {offsets = [0, 0], sizes = [4, 256], strides = [1, 1]} : vector<24x256xf32> to vector<4x256xf32>
    %10 = vector.extract_strided_slice %8 {offsets = [0, 0], sizes = [4, 256], strides = [1, 1]} : vector<16x256xf32> to vector<4x256xf32>
    %11 = arith.addf %9, %10 : vector<4x256xf32>
    %12 = arith.negf %11 : vector<4x256xf32>
    %13 = math.exp %12 : vector<4x256xf32>
    %cst_12 = arith.constant 1.000000e+00 : f32
    %14 = vector.broadcast %cst_12 : f32 to vector<4x256xf32>
    %15 = arith.addf %14, %13 : vector<4x256xf32>
    %16 = arith.divf %14, %15 : vector<4x256xf32>
    %17 = vector.extract_strided_slice %7 {offsets = [8, 0], sizes = [4, 256], strides = [1, 1]} : vector<24x256xf32> to vector<4x256xf32>
    %18 = vector.extract_strided_slice %8 {offsets = [8, 0], sizes = [4, 256], strides = [1, 1]} : vector<16x256xf32> to vector<4x256xf32>
    %19 = arith.addf %17, %18 : vector<4x256xf32>
    %cst_13 = arith.constant 1.000000e-01 : f32
    %20 = vector.broadcast %cst_13 : f32 to vector<4x256xf32>
    %21 = arith.subf %19, %20 : vector<4x256xf32>
    %22 = arith.negf %21 : vector<4x256xf32>
    %23 = math.exp %22 : vector<4x256xf32>
    %cst_14 = arith.constant 1.000000e+00 : f32
    %24 = vector.broadcast %cst_14 : f32 to vector<4x256xf32>
    %25 = arith.addf %24, %23 : vector<4x256xf32>
    %26 = arith.divf %24, %25 : vector<4x256xf32>
    %27 = arith.mulf %16, %4 : vector<4x256xf32>
    %28 = vector.extract_strided_slice %7 {offsets = [16, 0], sizes = [4, 256], strides = [1, 1]} : vector<24x256xf32> to vector<4x256xf32>
    %cst_15 = arith.constant dense<0.000000e+00> : vector<4x256xf32>
    %29 = tpu.matmul %2, %27, %cst_15 {dimension_numbers = #tpu.dot_dimension_numbers<[1], [0], [0], [1], [0, 0, 1, 1], [], []>} : vector<4x4xf32>, vector<4x256xf32>, vector<4x256xf32> -> vector<4x256xf32>
    %30 = arith.addf %28, %29 : vector<4x256xf32>
    %31 = math.tanh %30 : vector<4x256xf32>
    %32 = arith.subf %31, %4 : vector<4x256xf32>
    %33 = arith.mulf %26, %32 : vector<4x256xf32>
    %34 = arith.addf %4, %33 : vector<4x256xf32>
    %c0_16 = arith.constant 0 : index
    %c0_17 = arith.constant 0 : index
    %c0_18 = arith.constant 0 : index
    %35 = vector.load %arg7[%c0_16, %c0_17, %c0_18] : memref<1x4x256xf32, #tpu.memory_space<vmem>>, vector<1x4x256xf32>
    %36 = vector.shape_cast %35 : vector<1x4x256xf32> to vector<4x256xf32>
    %37 = vector.shape_cast %34 : vector<4x256xf32> to vector<1x4x256xf32>
    tpu.vector_store %arg7[%c0_16, %c0_17, %c0_18], %37 {strides = array<i32>} : memref<1x4x256xf32, #tpu.memory_space<vmem>>, vector<1x4x256xf32>,
    return
  }
  func.func @transform_0(%arg0: i32, %arg1: i32) -> (i32, i32, i32) {
    %c0_i32 = arith.constant 0 : i32
    %c0_i32_0 = arith.constant 0 : i32
    return %arg0, %c0_i32, %arg1 : i32, i32, i32
  }
  func.func @transform_1(%arg0: i32, %arg1: i32) -> (i32, i32, i32) {
    %c0_i32 = arith.constant 0 : i32
    %c0_i32_0 = arith.constant 0 : i32
    return %arg0, %c0_i32, %arg1 : i32, i32, i32
  }
  func.func @transform_2(%arg0: i32, %arg1: i32) -> (i32, i32) {
    %c0_i32 = arith.constant 0 : i32
    %c0_i32_0 = arith.constant 0 : i32
    %c0_i32_1 = arith.constant 0 : i32
    return %c0_i32, %c0_i32_0 : i32, i32
  }
  func.func @transform_3(%arg0: i32, %arg1: i32) -> (i32, i32) {
    %c0_i32 = arith.constant 0 : i32
    %c0_i32_0 = arith.constant 0 : i32
    %c0_i32_1 = arith.constant 0 : i32
    return %c0_i32, %c0_i32_0 : i32, i32
  }
  func.func @transform_4(%arg0: i32, %arg1: i32) -> (i32, i32) {
    %c0_i32 = arith.constant 0 : i32
    %c0_i32_0 = arith.constant 0 : i32
    %c0_i32_1 = arith.constant 0 : i32
    return %c0_i32, %c0_i32_0 : i32, i32
  }
  func.func @transform_5(%arg0: i32, %arg1: i32) -> (i32, i32, i32) {
    %c0_i32 = arith.constant 0 : i32
    %c0_i32_0 = arith.constant 0 : i32
    return %arg0, %c0_i32, %arg1 : i32, i32, i32
  }
}

</mosaic_0001>

<llo_original>
// kernel: tpu_custom_call.1
$region0: #{tpu_custom_call.1}
  #allocation0 [shape = 'u32[]', space=smem, size = 0x4, offset = 0x4, fixed_abs, tag = 'smem constant byte address 0x4 - core index']
  #allocation1 [shape = 'u32[144,128]{1,0:T(1,128)}', space=vmem, size = 0x12000, scoped, tag = 'internal scratch']
  %s0 = inlined_call_operand.vmem [shape: f32[2,4,256], index: 0, kind: input, shape index: {}]
  %s1 = inlined_call_operand.vmem [shape: f32[2,4,256], index: 1, kind: input, shape index: {}]
  %s2 = inlined_call_operand.vmem [shape: f32[24,4], index: 2, kind: input, shape index: {}]
  %s3 = inlined_call_operand.vmem [shape: f32[16,4], index: 3, kind: input, shape index: {}]
  %s4 = inlined_call_operand.vmem [shape: f32[4,4], index: 4, kind: input, shape index: {}]
  %s5 = inlined_call_operand.hbm [shape: f32[2,4,256], index: 5, kind: output, shape index: {}]
  %s6 = sld [smem:[#allocation0]]
  $region53: #{tpu_custom_call.1} parent=0
    _
  %s8 = ssub.s32 1, %s6
  %s9 = scalar_select 0, %s8, %s6
  $region1: #{tpu_custom_call.1} parent=0
    #allocation2 [shape = 'u8[8192]{0}', space=vmem, size = 0x2000, scoped, tag = 'output window, operand 0']
    #allocation3 [shape = 's32[2]{0}', space=sflag, size = 0x8, scoped, tag = 'scoped memory for tpu_custom_call.1']
    %10 = vsyncpa [#allocation3], 0
    %s11 = scalar_lea.sflag [#allocation3], 1
    %12 = vsyncpa %s11, 0
    loop: start=0, step=1, limit=4
    $region2: #{tpu_custom_call.1} parent=1 // loop_pre_header
      _
    $region3: #{tpu_custom_call.1} parent=1 // loop_header
      %s14 = sphi 0, %s18
      %p15 = scmp.ge.s32.totalorder %s14, 4
      %s21 = sphi 0, %s33
      %s22 = sphi 0, %s29
      %s23 = sphi 0, %s21
      %s24 = sphi 0, %s22
      %s25 = sphi 0, %s23
      %s26 = sphi 0, %s24
      %s38 = sphi 0, %s40
      %s41 = sphi 0, %s38
      %s42 = sphi 0, %s41
      %s58 = sphi 0, %s42
      %s66 = sphi 0, %s68
      %s69 = sphi 0, %s66
      %s70 = sphi 0, %s69
      %s86 = sphi 0, %s70
      %s90 = sphi 0, %s90
      %s92 = sphi 0, %s90
      %s93 = sphi 0, %s92
      %s107 = sphi 0, %s93
      %s111 = sphi 0, %s111
      %s113 = sphi 0, %s111
      %s114 = sphi 0, %s113
      %s128 = sphi 0, %s114
      %s132 = sphi 0, %s132
      %s134 = sphi 0, %s132
      %s135 = sphi 0, %s134
      %s149 = sphi 0, %s135
      %s157 = sphi 0, %s159
      %s160 = sphi 0, %s157
      %s161 = sphi 0, %s160
      %s177 = sphi 0, %s161
    $region4: #{tpu_custom_call.1} parent=1 // loop_header_branch
      %17 = sbr.rel (%p15) target = $region8
    $region5: #{tpu_custom_call.1} parent=1 // loop_body
      %s19 = ssub.s32 %s14, 1
      %s20 = ssub.s32 %s14, 2
      %s27 = sadd.s32 1, %s22
      %p28 = scmp.ge.s32.totalorder %s27, 1
      %s29 = scalar_select %p28, 0, %s27
      %s30 = sadd.s32 1, %s21
      %s31 = scalar_select %p28, %s30, %s21
      %p32 = scmp.ge.s32.totalorder %s31, 2
      %s33 = scalar_select %p32, 0, %s31
      %s34 = ssub.s32 %s21, %s33
      %s35 = ssub.s32 %s22, %s29
      %s36 = sor.u32 %s34, %s35
      %p37 = scmp.eq.s32.totalorder %s36, 0
      %s39 = sadd.s32 %s38, 1
      %s40 = scalar_select %p37, %s38, %s39
      %p43 = pneg %p37
      %p44 = scmp.eq.s32.totalorder %s14, 1
      %p45 = por %p43, %p44
      %p46 = scmp.ne.s32.totalorder %s38, %s41
      %p47 = scmp.eq.s32.totalorder %s14, 0
      %p48 = por %p46, %p47
      %p49 = scmp.ne.s32.totalorder %s38, %s41
      %p50 = scmp.eq.s32.totalorder %s19, 1
      %p51 = por %p49, %p50
      %p52 = scmp.ne.s32.totalorder %s41, %s42
      %p53 = scmp.eq.s32.totalorder %s19, 0
      %p54 = por %p52, %p53
      %p55 = scmp.ne.s32.totalorder %s41, %s42
      %p56 = scmp.eq.s32.totalorder %s20, 1
      %p57 = por %p55, %p56
      %p59 = scmp.ne.s32.totalorder %s42, %s58
      %p60 = scmp.eq.s32.totalorder %s20, 0
      %p61 = por %p59, %p60
      %s62 = ssub.s32 %s21, %s33
      %s63 = ssub.s32 %s22, %s29
      %s64 = sor.u32 %s62, %s63
      %p65 = scmp.eq.s32.totalorder %s64, 0
      %s67 = sadd.s32 %s66, 1
      %s68 = scalar_select %p65, %s66, %s67
      %p71 = pneg %p65
      %p72 = scmp.eq.s32.totalorder %s14, 1
      %p73 = por %p71, %p72
      %p74 = scmp.ne.s32.totalorder %s66, %s69
      %p75 = scmp.eq.s32.totalorder %s14, 0
      %p76 = por %p74, %p75
      %p77 = scmp.ne.s32.totalorder %s66, %s69
      %p78 = scmp.eq.s32.totalorder %s19, 1
      %p79 = por %p77, %p78
      %p80 = scmp.ne.s32.totalorder %s69, %s70
      %p81 = scmp.eq.s32.totalorder %s19, 0
      %p82 = por %p80, %p81
      %p83 = scmp.ne.s32.totalorder %s69, %s70
      %p84 = scmp.eq.s32.totalorder %s20, 1
      %p85 = por %p83, %p84
      %p87 = scmp.ne.s32.totalorder %s70, %s86
      %p88 = scmp.eq.s32.totalorder %s20, 0
      %p89 = por %p87, %p88
      %s91 = sadd.s32 %s90, 1
      %p94 = scmp.eq.s32.totalorder %s14, 1
      %p95 = scmp.ne.s32.totalorder %s90, %s92
      %p96 = scmp.eq.s32.totalorder %s14, 0
      %p97 = por %p95, %p96
      %p98 = scmp.ne.s32.totalorder %s90, %s92
      %p99 = scmp.eq.s32.totalorder %s19, 1
      %p100 = por %p98, %p99
      %p101 = scmp.ne.s32.totalorder %s92, %s93
      %p102 = scmp.eq.s32.totalorder %s19, 0
      %p103 = por %p101, %p102
      %p104 = scmp.ne.s32.totalorder %s92, %s93
      %p105 = scmp.eq.s32.totalorder %s20, 1
      %p106 = por %p104, %p105
      %p108 = scmp.ne.s32.totalorder %s93, %s107
      %p109 = scmp.eq.s32.totalorder %s20, 0
      %p110 = por %p108, %p109
      %s112 = sadd.s32 %s111, 1
      %p115 = scmp.eq.s32.totalorder %s14, 1
      %p116 = scmp.ne.s32.totalorder %s111, %s113
      %p117 = scmp.eq.s32.totalorder %s14, 0
      %p118 = por %p116, %p117
      %p119 = scmp.ne.s32.totalorder %s111, %s113
      %p120 = scmp.eq.s32.totalorder %s19, 1
      %p121 = por %p119, %p120
      %p122 = scmp.ne.s32.totalorder %s113, %s114
      %p123 = scmp.eq.s32.totalorder %s19, 0
      %p124 = por %p122, %p123
      %p125 = scmp.ne.s32.totalorder %s113, %s114
      %p126 = scmp.eq.s32.totalorder %s20, 1
      %p127 = por %p125, %p126
      %p129 = scmp.ne.s32.totalorder %s114, %s128
      %p130 = scmp.eq.s32.totalorder %s20, 0
      %p131 = por %p129, %p130
      %s133 = sadd.s32 %s132, 1
      %p136 = scmp.eq.s32.totalorder %s14, 1
      %p137 = scmp.ne.s32.totalorder %s132, %s134
      %p138 = scmp.eq.s32.totalorder %s14, 0
      %p139 = por %p137, %p138
      %p140 = scmp.ne.s32.totalorder %s132, %s134
      %p141 = scmp.eq.s32.totalorder %s19, 1
      %p142 = por %p140, %p141
      %p143 = scmp.ne.s32.totalorder %s134, %s135
      %p144 = scmp.eq.s32.totalorder %s19, 0
      %p145 = por %p143, %p144
      %p146 = scmp.ne.s32.totalorder %s134, %s135
      %p147 = scmp.eq.s32.totalorder %s20, 1
      %p148 = por %p146, %p147
      %p150 = scmp.ne.s32.totalorder %s135, %s149
      %p151 = scmp.eq.s32.totalorder %s20, 0
      %p152 = por %p150, %p151
      %s153 = ssub.s32 %s21, %s33
      %s154 = ssub.s32 %s22, %s29
      %s155 = sor.u32 %s153, %s154
      %p156 = scmp.eq.s32.totalorder %s155, 0
      %s158 = sadd.s32 %s157, 1
      %s159 = scalar_select %p156, %s157, %s158
      %p162 = pneg %p156
      %p163 = scmp.eq.s32.totalorder %s14, 1
      %p164 = por %p162, %p163
      %p165 = scmp.ne.s32.totalorder %s157, %s160
      %p166 = scmp.eq.s32.totalorder %s14, 0
      %p167 = por %p165, %p166
      %p168 = scmp.ne.s32.totalorder %s157, %s160
      %p169 = scmp.eq.s32.totalorder %s19, 1
      %p170 = por %p168, %p169
      %p171 = scmp.ne.s32.totalorder %s160, %s161
      %p172 = scmp.eq.s32.totalorder %s19, 0
      %p173 = por %p171, %p172
      %p174 = scmp.ne.s32.totalorder %s160, %s161
      %p175 = scmp.eq.s32.totalorder %s20, 1
      %p176 = por %p174, %p175
      %p178 = scmp.ne.s32.totalorder %s161, %s177
      %p179 = scmp.eq.s32.totalorder %s20, 0
      %p180 = por %p178, %p179
      %p181 = scmp.le.s32.totalorder 1, %s14
      %p182 = scmp.lt.s32.totalorder %s14, 3
      %p183 = pnand %p181, %p182
      %p184 = pneg %p183
      // Predicated region
      $region9: #{tpu_custom_call.1} parent=5 // pred_check
        _
      $region10: #{tpu_custom_call.1} parent=5 // pred_check_branch
        %186 = sbr.rel (%p183) target = $region12
      $region11: #{tpu_custom_call.1} parent=5 // pred_region
        %s187 = ssub.s32 %s14, 1
        // Predicated region
        $region13: #{tpu_custom_call.1} parent=11 // pred_check
          %p188 = pneg %p103
        $region14: #{tpu_custom_call.1} parent=11 // pred_check_branch
          %190 = sbr.rel (%p188) target = $region16
        $region15: #{tpu_custom_call.1} parent=11 // pred_region
          _
        $region16: #{tpu_custom_call.1} parent=11 // pred_fallthru
          _
        // Predicated region
        $region17: #{tpu_custom_call.1} parent=11 // pred_check
          %p191 = pneg %p124
        $region18: #{tpu_custom_call.1} parent=11 // pred_check_branch
          %193 = sbr.rel (%p191) target = $region20
        $region19: #{tpu_custom_call.1} parent=11 // pred_region
          _
        $region20: #{tpu_custom_call.1} parent=11 // pred_fallthru
          _
        // Predicated region
        $region21: #{tpu_custom_call.1} parent=11 // pred_check
          %p194 = pneg %p145
        $region22: #{tpu_custom_call.1} parent=11 // pred_check_branch
          %196 = sbr.rel (%p194) target = $region24
        $region23: #{tpu_custom_call.1} parent=11 // pred_region
          _
        $region24: #{tpu_custom_call.1} parent=11 // pred_fallthru
          _
      $region12: #{tpu_custom_call.1} parent=5 // pred_fallthru
        _
      %p197 = scmp.lt.s32.totalorder %s14, 2
      // Predicated region
      $region25: #{tpu_custom_call.1} parent=5 // pred_check
        %p198 = pneg %p197
      $region26: #{tpu_custom_call.1} parent=5 // pred_check_branch
        %200 = sbr.rel (%p198) target = $region28
      $region27: #{tpu_custom_call.1} parent=5 // pred_region
        // Predicated region
        $region29: #{tpu_custom_call.1} parent=27 // pred_check
          %p201 = pneg %p48
        $region30: #{tpu_custom_call.1} parent=27 // pred_check_branch
          %203 = sbr.rel (%p201) target = $region32
        $region31: #{tpu_custom_call.1} parent=27 // pred_region
          %s204 = smul.u32 2, %s22
          %p205 = scmp.lt.s32.totalorder %s21, 1
          %s206 = scalar_select %p205, %s21, 1
          %p207 = scmp.lt.s32.totalorder %s204, 1
          %s208 = scalar_select %p207, %s204, 1
          %s209 = smul.addr %s206, 2
          %s210 = sadd.s32 %s208, %s209
          %s211 = smul.addr %s210, 4
          %s212 = scalar_lea.vmem %s0, %s211
          %s213 = smul.u32 2, %s22
        $region32: #{tpu_custom_call.1} parent=27 // pred_fallthru
          _
        // Predicated region
        $region33: #{tpu_custom_call.1} parent=27 // pred_check
          %p214 = pneg %p76
        $region34: #{tpu_custom_call.1} parent=27 // pred_check_branch
          %216 = sbr.rel (%p214) target = $region36
        $region35: #{tpu_custom_call.1} parent=27 // pred_region
          %s217 = smul.u32 2, %s22
          %p218 = scmp.lt.s32.totalorder %s21, 1
          %s219 = scalar_select %p218, %s21, 1
          %p220 = scmp.lt.s32.totalorder %s217, 1
          %s221 = scalar_select %p220, %s217, 1
          %s222 = smul.addr %s219, 2
          %s223 = sadd.s32 %s221, %s222
          %s224 = smul.addr %s223, 4
          %s225 = scalar_lea.vmem %s1, %s224
          %s226 = smul.u32 2, %s22
        $region36: #{tpu_custom_call.1} parent=27 // pred_fallthru
          _
      $region28: #{tpu_custom_call.1} parent=5 // pred_fallthru
        _
      %p227 = scmp.le.s32.totalorder 1, %s14
      %p228 = scmp.lt.s32.totalorder %s14, 3
      %p229 = pnand %p227, %p228
      %p230 = pneg %p229
      // Predicated region
      $region37: #{tpu_custom_call.1} parent=5 // pred_check
        _
      $region38: #{tpu_custom_call.1} parent=5 // pred_check_branch
        %232 = sbr.rel (%p229) target = $region40
      $region39: #{tpu_custom_call.1} parent=5 // pred_region
        %s233 = ssub.s32 %s14, 1
        %s234 = smul.u32 2, %s24
        %p235 = scmp.lt.s32.totalorder %s23, 1
        %s236 = scalar_select %p235, %s23, 1
        %p237 = scmp.lt.s32.totalorder %s234, 1
        %s238 = scalar_select %p237, %s234, 1
        %s239 = smul.addr %s236, 2
        %s240 = sadd.s32 %s238, %s239
        %s241 = smul.addr %s240, 4
        %s242 = scalar_lea.vmem %s0, %s241
        %p243 = pneg %p54
        %p244 = pneg %p51
        %s245 = smul.u32 2, %s24
        %p246 = scmp.lt.s32.totalorder %s23, 1
        %s247 = scalar_select %p246, %s23, 1
        %p248 = scmp.lt.s32.totalorder %s245, 1
        %s249 = scalar_select %p248, %s245, 1
        %s250 = smul.addr %s247, 2
        %s251 = sadd.s32 %s249, %s250
        %s252 = smul.addr %s251, 4
        %s253 = scalar_lea.vmem %s1, %s252
        %p254 = pneg %p82
        %p255 = pneg %p79
        %p256 = pneg %p103
        %p257 = pneg %p100
        %p258 = pneg %p124
        %p259 = pneg %p121
        %p260 = pneg %p145
        %p261 = pneg %p142
        %p262 = pneg %p173
        %p263 = pneg %p170
        %s264 = sand.u32 %s160, 1
        %s265 = scalar_lea.sflag [#allocation3], %s264
        %s266 = sand.u32 %s160, 1
        %s267 = smul.addr %s266, 8
        %s268 = scalar_lea.vmem [#allocation2], %s267
        %s269 = smul.u32 2, %s24
        %p270 = scmp.lt.s32.totalorder %s23, 1
        %s271 = scalar_select %p270, %s23, 1
        %p272 = scmp.lt.s32.totalorder %s269, 1
        %s273 = scalar_select %p272, %s269, 1
        %s274 = smul.addr %s271, 2
        %s275 = sadd.s32 %s273, %s274
        %s276 = smul.addr %s275, 4
        %s277 = scalar_lea.vmem %s0, %s276
        %s278 = smul.u32 2, %s24
        %s279 = smul.u32 2, %s24
        %p280 = scmp.lt.s32.totalorder %s23, 1
        %s281 = scalar_select %p280, %s23, 1
        %p282 = scmp.lt.s32.totalorder %s279, 1
        %s283 = scalar_select %p282, %s279, 1
        %s284 = smul.addr %s281, 2
        %s285 = sadd.s32 %s283, %s284
        %s286 = smul.addr %s285, 4
        %s287 = scalar_lea.vmem %s1, %s286
        %s288 = smul.u32 2, %s24
        %s289 = smul.u32 2, %s24
        %v290 = vld [vmem:[%s2] sm:$0xff]
        %v291 = vld [vmem:[%s2 + $0x8] sm:$0xff]
        %v292 = vld [vmem:[%s2 + $0x10] sm:$0xff]
        %v293 = vld [vmem:[%s3] sm:$0xff]
        %v294 = vld [vmem:[%s3 + $0x8] sm:$0xff]
        %v295 = vld [vmem:[%s4] sm:$0xf]
        %v296 = vld [vmem:[%s277] sm:$0xff]
        %v297 = vld [vmem:[%s287] sm:$0xff]
        %v299 = vcombine.high %v297, %v297
        %vm300 = vcmask 31744
        %v302 = vsel %vm300, %v290, 0
        %v305 = vsel %vm300, %v291, 0
        %v308 = vsel %vm300, %v292, 0
        %vm310 = vcmask 1043456
        %v311 = vsel %vm310, %v297, 0
        %v313 = vsel %vm310, %v299, 0
        %315 = vmatprep.subr.mxu0 %v313
        %316 = vmatpush1.msra.mxu0 %v311
        %317 = vmatprep.subr.mxu0 0.0
        %318 = vmatpush1.msra.mxu0 0.0
        %319 = vmatprep.subr.mxu0 0.0
        %320 = vmatpush1.msra.mxu0 0.0
        %321 = vmatprep.subr.mxu0 0.0
        %322 = vmatpush1.msra.mxu0 0.0
        %323 = vmatprep.subr.mxu0 0.0
        %324 = vmatpush1.msra.mxu0 0.0
        %325 = vmatprep.subr.mxu0 0.0
        %326 = vmatpush1.msra.mxu0 0.0
        %327 = vmatprep.subr.mxu0 0.0
        %328 = vmatpush1.msra.mxu0 0.0
        %329 = vmatprep.subr.mxu0 0.0
        %330 = vmatpush1.msra.mxu0 0.0
        %331 = vmatprep.subr.mxu0 0.0
        %332 = vmatpush1.msra.mxu0 0.0
        %333 = vmatprep.subr.mxu0 0.0
        %334 = vmatpush1.msra.mxu0 0.0
        %335 = vmatprep.subr.mxu0 0.0
        %336 = vmatpush1.msra.mxu0 0.0
        %337 = vmatprep.subr.mxu0 0.0
        %338 = vmatpush1.msra.mxu0 0.0
        %339 = vmatprep.subr.mxu0 0.0
        %340 = vmatpush1.msra.mxu0 0.0
        %341 = vmatprep.subr.mxu0 0.0
        %342 = vmatpush1.msra.mxu0 0.0
        %343 = vmatprep.subr.mxu0 0.0
        %344 = vmatpush1.msra.mxu0 0.0
        %345 = vmatprep.subr.mxu0 0.0
        %346 = vmatpush1.msra.mxu0 0.0
        %347 = vmatprep.subr.mxu0 0.0
        %348 = vmatpush1.msra.mxu0 0.0
        %349 = vmatprep.subr.mxu0 0.0
        %350 = vmatpush1.msra.mxu0 0.0
        %351 = vmatprep.subr.mxu0 0.0
        %352 = vmatpush1.msra.mxu0 0.0
        %353 = vmatprep.subr.mxu0 0.0
        %354 = vmatpush1.msra.mxu0 0.0
        %355 = vmatprep.subr.mxu0 0.0
        %356 = vmatpush1.msra.mxu0 0.0
        %357 = vmatprep.subr.mxu0 0.0
        %358 = vmatpush1.msra.mxu0 0.0
        %359 = vmatprep.subr.mxu0 0.0
        %360 = vmatpush1.msra.mxu0 0.0
        %361 = vmatprep.subr.mxu0 0.0
        %362 = vmatpush1.msra.mxu0 0.0
        %363 = vmatprep.subr.mxu0 0.0
        %364 = vmatpush1.msra.mxu0 0.0
        %365 = vmatprep.subr.mxu0 0.0
        %366 = vmatpush1.msra.mxu0 0.0
        %367 = vmatprep.subr.mxu0 0.0
        %368 = vmatpush1.msra.mxu0 0.0
        %369 = vmatprep.subr.mxu0 0.0
        %370 = vmatpush1.msra.mxu0 0.0
        %371 = vmatprep.subr.mxu0 0.0
        %372 = vmatpush1.msra.mxu0 0.0
        %373 = vmatprep.subr.mxu0 0.0
        %374 = vmatpush1.msra.mxu0 0.0
        %375 = vmatprep.subr.mxu0 0.0
        %376 = vmatpush1.msra.mxu0 0.0
        %377 = vmatprep.subr.mxu0 0.0
        %378 = vmatpush1.msra.mxu0 0.0
        %379 = vmatprep.mubr.f32.mxu0 0.0
        %380 = vmatmul.mubr.f32.gmra.mrb[0].mxu0 %v302
        %v381 = vpop.f32.mrb[0].mxu0
        %v382 = vadd.f32 0.0, %v381
        %v383 = vpop.f32.mrb[0].mxu0
        %v384 = vadd.f32 0.0, %v383
        %385 = vmatprep.mubr.f32.mxu0 0.0
        %386 = vmatmul.mubr.f32.gmra.mrb[0].mxu0 %v305
        %v387 = vpop.f32.mrb[0].mxu0
        %v388 = vadd.f32 0.0, %v387
        %v389 = vpop.f32.mrb[0].mxu0
        %v390 = vadd.f32 0.0, %v389
        %391 = vmatprep.mubr.f32.mxu0 0.0
        %392 = vmatmul.mubr.f32.gmra.mrb[0].mxu0 %v308
        %v393 = vpop.f32.mrb[0].mxu0
        %v394 = vadd.f32 0.0, %v393
        %v395 = vpop.f32.mrb[0].mxu0
        %v396 = vadd.f32 0.0, %v395
        %397 = vdwg.mxu0
        %v399 = vcombine.high %v296, %v296
        %v401 = vsel %vm300, %v293, 0
        %v404 = vsel %vm300, %v294, 0
        %v406 = vsel %vm310, %v296, 0
        %v408 = vsel %vm310, %v399, 0
        %410 = vmatprep.subr.mxu0 %v408
        %411 = vmatpush1.msra.mxu0 %v406
        %412 = vmatprep.subr.mxu0 0.0
        %413 = vmatpush1.msra.mxu0 0.0
        %414 = vmatprep.subr.mxu0 0.0
        %415 = vmatpush1.msra.mxu0 0.0
        %416 = vmatprep.subr.mxu0 0.0
        %417 = vmatpush1.msra.mxu0 0.0
        %418 = vmatprep.subr.mxu0 0.0
        %419 = vmatpush1.msra.mxu0 0.0
        %420 = vmatprep.subr.mxu0 0.0
        %421 = vmatpush1.msra.mxu0 0.0
        %422 = vmatprep.subr.mxu0 0.0
        %423 = vmatpush1.msra.mxu0 0.0
        %424 = vmatprep.subr.mxu0 0.0
        %425 = vmatpush1.msra.mxu0 0.0
        %426 = vmatprep.subr.mxu0 0.0
        %427 = vmatpush1.msra.mxu0 0.0
        %428 = vmatprep.subr.mxu0 0.0
        %429 = vmatpush1.msra.mxu0 0.0
        %430 = vmatprep.subr.mxu0 0.0
        %431 = vmatpush1.msra.mxu0 0.0
        %432 = vmatprep.subr.mxu0 0.0
        %433 = vmatpush1.msra.mxu0 0.0
        %434 = vmatprep.subr.mxu0 0.0
        %435 = vmatpush1.msra.mxu0 0.0
        %436 = vmatprep.subr.mxu0 0.0
        %437 = vmatpush1.msra.mxu0 0.0
        %438 = vmatprep.subr.mxu0 0.0
        %439 = vmatpush1.msra.mxu0 0.0
        %440 = vmatprep.subr.mxu0 0.0
        %441 = vmatpush1.msra.mxu0 0.0
        %442 = vmatprep.subr.mxu0 0.0
        %443 = vmatpush1.msra.mxu0 0.0
        %444 = vmatprep.subr.mxu0 0.0
        %445 = vmatpush1.msra.mxu0 0.0
        %446 = vmatprep.subr.mxu0 0.0
        %447 = vmatpush1.msra.mxu0 0.0
        %448 = vmatprep.subr.mxu0 0.0
        %449 = vmatpush1.msra.mxu0 0.0
        %450 = vmatprep.subr.mxu0 0.0
        %451 = vmatpush1.msra.mxu0 0.0
        %452 = vmatprep.subr.mxu0 0.0
        %453 = vmatpush1.msra.mxu0 0.0
        %454 = vmatprep.subr.mxu0 0.0
        %455 = vmatpush1.msra.mxu0 0.0
        %456 = vmatprep.subr.mxu0 0.0
        %457 = vmatpush1.msra.mxu0 0.0
        %458 = vmatprep.subr.mxu0 0.0
        %459 = vmatpush1.msra.mxu0 0.0
        %460 = vmatprep.subr.mxu0 0.0
        %461 = vmatpush1.msra.mxu0 0.0
        %462 = vmatprep.subr.mxu0 0.0
        %463 = vmatpush1.msra.mxu0 0.0
        %464 = vmatprep.subr.mxu0 0.0
        %465 = vmatpush1.msra.mxu0 0.0
        %466 = vmatprep.subr.mxu0 0.0
        %467 = vmatpush1.msra.mxu0 0.0
        %468 = vmatprep.subr.mxu0 0.0
        %469 = vmatpush1.msra.mxu0 0.0
        %470 = vmatprep.subr.mxu0 0.0
        %471 = vmatpush1.msra.mxu0 0.0
        %472 = vmatprep.subr.mxu0 0.0
        %473 = vmatpush1.msra.mxu0 0.0
        %474 = vmatprep.mubr.f32.mxu0 0.0
        %475 = vmatmul.mubr.f32.gmra.mrb[0].mxu0 %v401
        %v476 = vpop.f32.mrb[0].mxu0
        %v477 = vadd.f32 0.0, %v476
        %v478 = vpop.f32.mrb[0].mxu0
        %v479 = vadd.f32 0.0, %v478
        %480 = vmatprep.mubr.f32.mxu0 0.0
        %481 = vmatmul.mubr.f32.gmra.mrb[0].mxu0 %v404
        %v482 = vpop.f32.mrb[0].mxu0
        %v483 = vadd.f32 0.0, %v482
        %v484 = vpop.f32.mrb[0].mxu0
        %v485 = vadd.f32 0.0, %v484
        %486 = vdwg.mxu0
        %v487 = vadd.f32 %v382, %v477
        %v488 = vadd.f32 %v384, %v479
        %v489 = vxor.u32 %v487, 2147483648
        %v490 = vxor.u32 %v488, 2147483648
        %v491 = vmul.f32 %v489, 1.442695
        %v492 = vpow.pop %v491
        %v493 = vmul.f32 %v490, 1.442695
        %v494 = vpow.pop %v493
        %v495 = vadd.f32 %v492, 1.0
        %v496 = vadd.f32 %v494, 1.0
        %v497 = vrcp.pop %v495
        %v498 = vmul.f32 1.0, %v497
        %v499 = vrcp.pop %v496
        %v500 = vmul.f32 1.0, %v499
        %v501 = vadd.f32 %v388, %v483
        %v502 = vadd.f32 %v390, %v485
        %v503 = vsub.f32 %v501, 0.1
        %v504 = vsub.f32 %v502, 0.1
        %v505 = vxor.u32 %v503, 2147483648
        %v506 = vxor.u32 %v504, 2147483648
        %v507 = vmul.f32 %v505, 1.442695
        %v508 = vpow.pop %v507
        %v509 = vmul.f32 %v506, 1.442695
        %v510 = vpow.pop %v509
        %v511 = vadd.f32 %v508, 1.0
        %v512 = vadd.f32 %v510, 1.0
        %v513 = vrcp.pop %v511
        %v514 = vmul.f32 1.0, %v513
        %v515 = vrcp.pop %v512
        %v516 = vmul.f32 1.0, %v515
        %v518 = vmul.f32 %v498, %v296
        %v519 = vmul.f32 %v500, %v399
        %v521 = vsel %vm300, %v295, 0
        %v524 = vsel %vm310, %v518, 0
        %v527 = vsel %vm310, %v519, 0
        %529 = vmatprep.subr.mxu0 %v527
        %530 = vmatpush1.msra.mxu0 %v524
        %531 = vmatprep.subr.mxu0 0.0
        %532 = vmatpush1.msra.mxu0 0.0
        %533 = vmatprep.subr.mxu0 0.0
        %534 = vmatpush1.msra.mxu0 0.0
        %535 = vmatprep.subr.mxu0 0.0
        %536 = vmatpush1.msra.mxu0 0.0
        %537 = vmatprep.subr.mxu0 0.0
        %538 = vmatpush1.msra.mxu0 0.0
        %539 = vmatprep.subr.mxu0 0.0
        %540 = vmatpush1.msra.mxu0 0.0
        %541 = vmatprep.subr.mxu0 0.0
        %542 = vmatpush1.msra.mxu0 0.0
        %543 = vmatprep.subr.mxu0 0.0
        %544 = vmatpush1.msra.mxu0 0.0
        %545 = vmatprep.subr.mxu0 0.0
        %546 = vmatpush1.msra.mxu0 0.0
        %547 = vmatprep.subr.mxu0 0.0
        %548 = vmatpush1.msra.mxu0 0.0
        %549 = vmatprep.subr.mxu0 0.0
        %550 = vmatpush1.msra.mxu0 0.0
        %551 = vmatprep.subr.mxu0 0.0
        %552 = vmatpush1.msra.mxu0 0.0
        %553 = vmatprep.subr.mxu0 0.0
        %554 = vmatpush1.msra.mxu0 0.0
        %555 = vmatprep.subr.mxu0 0.0
        %556 = vmatpush1.msra.mxu0 0.0
        %557 = vmatprep.subr.mxu0 0.0
        %558 = vmatpush1.msra.mxu0 0.0
        %559 = vmatprep.subr.mxu0 0.0
        %560 = vmatpush1.msra.mxu0 0.0
        %561 = vmatprep.subr.mxu0 0.0
        %562 = vmatpush1.msra.mxu0 0.0
        %563 = vmatprep.subr.mxu0 0.0
        %564 = vmatpush1.msra.mxu0 0.0
        %565 = vmatprep.subr.mxu0 0.0
        %566 = vmatpush1.msra.mxu0 0.0
        %567 = vmatprep.subr.mxu0 0.0
        %568 = vmatpush1.msra.mxu0 0.0
        %569 = vmatprep.subr.mxu0 0.0
        %570 = vmatpush1.msra.mxu0 0.0
        %571 = vmatprep.subr.mxu0 0.0
        %572 = vmatpush1.msra.mxu0 0.0
        %573 = vmatprep.subr.mxu0 0.0
        %574 = vmatpush1.msra.mxu0 0.0
        %575 = vmatprep.subr.mxu0 0.0
        %576 = vmatpush1.msra.mxu0 0.0
        %577 = vmatprep.subr.mxu0 0.0
        %578 = vmatpush1.msra.mxu0 0.0
        %579 = vmatprep.subr.mxu0 0.0
        %580 = vmatpush1.msra.mxu0 0.0
        %581 = vmatprep.subr.mxu0 0.0
        %582 = vmatpush1.msra.mxu0 0.0
        %583 = vmatprep.subr.mxu0 0.0
        %584 = vmatpush1.msra.mxu0 0.0
        %585 = vmatprep.subr.mxu0 0.0
        %586 = vmatpush1.msra.mxu0 0.0
        %587 = vmatprep.subr.mxu0 0.0
        %588 = vmatpush1.msra.mxu0 0.0
        %589 = vmatprep.subr.mxu0 0.0
        %590 = vmatpush1.msra.mxu0 0.0
        %591 = vmatprep.subr.mxu0 0.0
        %592 = vmatpush1.msra.mxu0 0.0
        %593 = vmatprep.mubr.f32.mxu0 0.0
        %594 = vmatmul.mubr.f32.gmra.mrb[0].mxu0 %v521
        %v595 = vpop.f32.mrb[0].mxu0
        %v596 = vadd.f32 0.0, %v595
        %v597 = vpop.f32.mrb[0].mxu0
        %v598 = vadd.f32 0.0, %v597
        %599 = vdwg.mxu0
        %v600 = vadd.f32 %v394, %v596
        %v601 = vadd.f32 %v396, %v598
        %v602 = vtanh.pop %v600
        %v603 = vtanh.pop %v601
        %v604 = vsub.f32 %v602, %v296
        %v605 = vsub.f32 %v603, %v399
        %v606 = vmul.f32 %v514, %v604
        %v607 = vmul.f32 %v516, %v605
        %v610 = vcombine.low %v606, %v607
        %v612 = vadd.f32 %v296, %v610
        %613 = vst [vmem:[%s268] sm:$0xff] %v612
        %s614 = sand.u32 %s160, 1
        %s615 = scalar_lea.sflag [#allocation3], %s614
        %s616 = sand.u32 %s160, 1
        %s617 = smul.addr %s616, 8
        %s618 = scalar_lea.vmem [#allocation2], %s617
        // Predicated region
        $region41: #{tpu_custom_call.1} parent=39 // pred_check
          %p619 = pneg %p170
        $region42: #{tpu_custom_call.1} parent=39 // pred_check_branch
          %621 = sbr.rel (%p619) target = $region44
        $region43: #{tpu_custom_call.1} parent=39 // pred_region
          %s622 = smul.u32 2, %s24
          %s624 = ssub.s32 128, 128
          %625 = vsyncadd %s615, %s624
          %s626 = smul.addr %s23, 2
          %s627 = sadd.s32 %s622, %s626
          %s628 = smul.addr %s627, 64
          %s629 = scalar_lea.hbm %s5, %s628
          %s631 = sshll.u32 %s618, 4
          %s632 = int_to_ptr.vmem [resolvable:$true] %s631
          %634 = dma.vmem_to_hbm [thread:$0]  %s632, 128, %s629, %s615
        $region44: #{tpu_custom_call.1} parent=39 // pred_fallthru
          _
      $region40: #{tpu_custom_call.1} parent=5 // pred_fallthru
        _
      %p635 = scmp.le.s32.totalorder 2, %s14
      // Predicated region
      $region45: #{tpu_custom_call.1} parent=5 // pred_check
        %p636 = pneg %p635
      $region46: #{tpu_custom_call.1} parent=5 // pred_check_branch
        %638 = sbr.rel (%p636) target = $region48
      $region47: #{tpu_custom_call.1} parent=5 // pred_region
        %s639 = ssub.s32 %s14, 2
        // Predicated region
        $region49: #{tpu_custom_call.1} parent=47 // pred_check
          %p640 = pneg %p176
        $region50: #{tpu_custom_call.1} parent=47 // pred_check_branch
          %642 = sbr.rel (%p640) target = $region52
        $region51: #{tpu_custom_call.1} parent=47 // pred_region
          %s643 = sand.u32 %s161, 1
          %s644 = scalar_lea.sflag [#allocation3], %s643
          %s645 = sand.u32 %s161, 1
          %s646 = smul.addr %s645, 8
          %s647 = scalar_lea.vmem [#allocation2], %s646
          %648 = dma.done %s644, 128
        $region52: #{tpu_custom_call.1} parent=47 // pred_fallthru
          _
      $region48: #{tpu_custom_call.1} parent=5 // pred_fallthru
        _
    $region6: #{tpu_custom_call.1} parent=1 // loop_footer
      %s18 = sadd.s32 1, %s14
    $region7: #{tpu_custom_call.1} parent=1 // loop_footer_branch
      %13 = sbr.rel target = $region3
    $region8: #{tpu_custom_call.1} parent=1 // loop_exit
      _
    %649 = vsyncpa [#allocation3], 1
    %s650 = scalar_lea.sflag [#allocation3], 1
    %651 = vsyncpa %s650, 1

// kernel: tpu_custom_call.1
$region0: #{tpu_custom_call.1}
  #allocation0 [shape = 'u32[]', space=smem, size = 0x4, offset = 0x4, fixed_abs, tag = 'smem constant byte address 0x4 - core index']
  #allocation1 [shape = 'u32[144,128]{1,0:T(1,128)}', space=vmem, size = 0x12000, scoped, tag = 'internal scratch']
  %s0 = inlined_call_operand.vmem [shape: f32[2,4,256], index: 0, kind: input, shape index: {}]
  %s1 = inlined_call_operand.vmem [shape: f32[2,4,256], index: 1, kind: input, shape index: {}]
  %s2 = inlined_call_operand.vmem [shape: f32[24,4], index: 2, kind: input, shape index: {}]
  %s3 = inlined_call_operand.vmem [shape: f32[16,4], index: 3, kind: input, shape index: {}]
  %s4 = inlined_call_operand.vmem [shape: f32[4,4], index: 4, kind: input, shape index: {}]
  %s5 = inlined_call_operand.hbm [shape: f32[2,4,256], index: 5, kind: output, shape index: {}]
  %s6 = sld [smem:[#allocation0]]
  $region53: #{tpu_custom_call.1} parent=0
    _
  %s8 = ssub.s32 1, %s6
  %s9 = scalar_select 0, %s8, %s6
  $region1: #{tpu_custom_call.1} parent=0
    #allocation2 [shape = 'u8[8192]{0}', space=vmem, size = 0x2000, scoped, tag = 'output window, operand 0']
    #allocation3 [shape = 's32[2]{0}', space=sflag, size = 0x8, scoped, tag = 'scoped memory for tpu_custom_call.1']
    %10 = vsyncpa [#allocation3], 0
    %s11 = scalar_lea.sflag [#allocation3], 1
    %12 = vsyncpa %s11, 0
    loop: start=0, step=1, limit=4
    $region2: #{tpu_custom_call.1} parent=1 // loop_pre_header
      _
    $region3: #{tpu_custom_call.1} parent=1 // loop_header
      %s14 = sphi 0, %s18
      %p15 = scmp.ge.s32.totalorder %s14, 4
      %s21 = sphi 0, %s33
      %s22 = sphi 0, %s29
      %s23 = sphi 0, %s21
      %s24 = sphi 0, %s22
      %s25 = sphi 0, %s23
      %s26 = sphi 0, %s24
      %s38 = sphi 0, %s40
      %s41 = sphi 0, %s38
      %s42 = sphi 0, %s41
      %s58 = sphi 0, %s42
      %s66 = sphi 0, %s68
      %s69 = sphi 0, %s66
      %s70 = sphi 0, %s69
      %s86 = sphi 0, %s70
      %s90 = sphi 0, %s90
      %s92 = sphi 0, %s90
      %s93 = sphi 0, %s92
      %s107 = sphi 0, %s93
      %s111 = sphi 0, %s111
      %s113 = sphi 0, %s111
      %s114 = sphi 0, %s113
      %s128 = sphi 0, %s114
      %s132 = sphi 0, %s132
      %s134 = sphi 0, %s132
      %s135 = sphi 0, %s134
      %s149 = sphi 0, %s135
      %s157 = sphi 0, %s159
      %s160 = sphi 0, %s157
      %s161 = sphi 0, %s160
      %s177 = sphi 0, %s161
    $region4: #{tpu_custom_call.1} parent=1 // loop_header_branch
      %17 = sbr.rel (%p15) target = $region8
    $region5: #{tpu_custom_call.1} parent=1 // loop_body
      %s19 = ssub.s32 %s14, 1
      %s20 = ssub.s32 %s14, 2
      %s27 = sadd.s32 1, %s22
      %p28 = scmp.ge.s32.totalorder %s27, 1
      %s29 = scalar_select %p28, 0, %s27
      %s30 = sadd.s32 1, %s21
      %s31 = scalar_select %p28, %s30, %s21
      %p32 = scmp.ge.s32.totalorder %s31, 2
      %s33 = scalar_select %p32, 0, %s31
      %s34 = ssub.s32 %s21, %s33
      %s35 = ssub.s32 %s22, %s29
      %s36 = sor.u32 %s34, %s35
      %p37 = scmp.eq.s32.totalorder %s36, 0
      %s39 = sadd.s32 %s38, 1
      %s40 = scalar_select %p37, %s38, %s39
      %p43 = pneg %p37
      %p44 = scmp.eq.s32.totalorder %s14, 1
      %p45 = por %p43, %p44
      %p46 = scmp.ne.s32.totalorder %s38, %s41
      %p47 = scmp.eq.s32.totalorder %s14, 0
      %p48 = por %p46, %p47
      %p49 = scmp.ne.s32.totalorder %s38, %s41
      %p50 = scmp.eq.s32.totalorder %s19, 1
      %p51 = por %p49, %p50
      %p52 = scmp.ne.s32.totalorder %s41, %s42
      %p53 = scmp.eq.s32.totalorder %s19, 0
      %p54 = por %p52, %p53
      %p55 = scmp.ne.s32.totalorder %s41, %s42
      %p56 = scmp.eq.s32.totalorder %s20, 1
      %p57 = por %p55, %p56
      %p59 = scmp.ne.s32.totalorder %s42, %s58
      %p60 = scmp.eq.s32.totalorder %s20, 0
      %p61 = por %p59, %p60
      %s62 = ssub.s32 %s21, %s33
      %s63 = ssub.s32 %s22, %s29
      %s64 = sor.u32 %s62, %s63
      %p65 = scmp.eq.s32.totalorder %s64, 0
      %s67 = sadd.s32 %s66, 1
      %s68 = scalar_select %p65, %s66, %s67
      %p71 = pneg %p65
      %p72 = scmp.eq.s32.totalorder %s14, 1
      %p73 = por %p71, %p72
      %p74 = scmp.ne.s32.totalorder %s66, %s69
      %p75 = scmp.eq.s32.totalorder %s14, 0
      %p76 = por %p74, %p75
      %p77 = scmp.ne.s32.totalorder %s66, %s69
      %p78 = scmp.eq.s32.totalorder %s19, 1
      %p79 = por %p77, %p78
      %p80 = scmp.ne.s32.totalorder %s69, %s70
      %p81 = scmp.eq.s32.totalorder %s19, 0
      %p82 = por %p80, %p81
      %p83 = scmp.ne.s32.totalorder %s69, %s70
      %p84 = scmp.eq.s32.totalorder %s20, 1
      %p85 = por %p83, %p84
      %p87 = scmp.ne.s32.totalorder %s70, %s86
      %p88 = scmp.eq.s32.totalorder %s20, 0
      %p89 = por %p87, %p88
      %s91 = sadd.s32 %s90, 1
      %p94 = scmp.eq.s32.totalorder %s14, 1
      %p95 = scmp.ne.s32.totalorder %s90, %s92
      %p96 = scmp.eq.s32.totalorder %s14, 0
      %p97 = por %p95, %p96
      %p98 = scmp.ne.s32.totalorder %s90, %s92
      %p99 = scmp.eq.s32.totalorder %s19, 1
      %p100 = por %p98, %p99
      %p101 = scmp.ne.s32.totalorder %s92, %s93
      %p102 = scmp.eq.s32.totalorder %s19, 0
      %p103 = por %p101, %p102
      %p104 = scmp.ne.s32.totalorder %s92, %s93
      %p105 = scmp.eq.s32.totalorder %s20, 1
      %p106 = por %p104, %p105
      %p108 = scmp.ne.s32.totalorder %s93, %s107
      %p109 = scmp.eq.s32.totalorder %s20, 0
      %p110 = por %p108, %p109
      %s112 = sadd.s32 %s111, 1
      %p115 = scmp.eq.s32.totalorder %s14, 1
      %p116 = scmp.ne.s32.totalorder %s111, %s113
      %p117 = scmp.eq.s32.totalorder %s14, 0
      %p118 = por %p116, %p117
      %p119 = scmp.ne.s32.totalorder %s111, %s113
      %p120 = scmp.eq.s32.totalorder %s19, 1
      %p121 = por %p119, %p120
      %p122 = scmp.ne.s32.totalorder %s113, %s114
      %p123 = scmp.eq.s32.totalorder %s19, 0
      %p124 = por %p122, %p123
      %p125 = scmp.ne.s32.totalorder %s113, %s114
      %p126 = scmp.eq.s32.totalorder %s20, 1
      %p127 = por %p125, %p126
      %p129 = scmp.ne.s32.totalorder %s114, %s128
      %p130 = scmp.eq.s32.totalorder %s20, 0
      %p131 = por %p129, %p130
      %s133 = sadd.s32 %s132, 1
      %p136 = scmp.eq.s32.totalorder %s14, 1
      %p137 = scmp.ne.s32.totalorder %s132, %s134
      %p138 = scmp.eq.s32.totalorder %s14, 0
      %p139 = por %p137, %p138
      %p140 = scmp.ne.s32.totalorder %s132, %s134
      %p141 = scmp.eq.s32.totalorder %s19, 1
      %p142 = por %p140, %p141
      %p143 = scmp.ne.s32.totalorder %s134, %s135
      %p144 = scmp.eq.s32.totalorder %s19, 0
      %p145 = por %p143, %p144
      %p146 = scmp.ne.s32.totalorder %s134, %s135
      %p147 = scmp.eq.s32.totalorder %s20, 1
      %p148 = por %p146, %p147
      %p150 = scmp.ne.s32.totalorder %s135, %s149
      %p151 = scmp.eq.s32.totalorder %s20, 0
      %p152 = por %p150, %p151
      %s153 = ssub.s32 %s21, %s33
      %s154 = ssub.s32 %s22, %s29
      %s155 = sor.u32 %s153, %s154
      %p156 = scmp.eq.s32.totalorder %s155, 0
      %s158 = sadd.s32 %s157, 1
      %s159 = scalar_select %p156, %s157, %s158
      %p162 = pneg %p156
      %p163 = scmp.eq.s32.totalorder %s14, 1
      %p164 = por %p162, %p163
      %p165 = scmp.ne.s32.totalorder %s157, %s160
      %p166 = scmp.eq.s32.totalorder %s14, 0
      %p167 = por %p165, %p166
      %p168 = scmp.ne.s32.totalorder %s157, %s160
      %p169 = scmp.eq.s32.totalorder %s19, 1
      %p170 = por %p168, %p169
      %p171 = scmp.ne.s32.totalorder %s160, %s161
      %p172 = scmp.eq.s32.totalorder %s19, 0
      %p173 = por %p171, %p172
      %p174 = scmp.ne.s32.totalorder %s160, %s161
      %p175 = scmp.eq.s32.totalorder %s20, 1
      %p176 = por %p174, %p175
      %p178 = scmp.ne.s32.totalorder %s161, %s177
      %p179 = scmp.eq.s32.totalorder %s20, 0
      %p180 = por %p178, %p179
      %p181 = scmp.le.s32.totalorder 1, %s14
      %p182 = scmp.lt.s32.totalorder %s14, 3
      %p183 = pnand %p181, %p182
      %p184 = pneg %p183
      // Predicated region
      $region9: #{tpu_custom_call.1} parent=5 // pred_check
        _
      $region10: #{tpu_custom_call.1} parent=5 // pred_check_branch
        %186 = sbr.rel (%p183) target = $region12
      $region11: #{tpu_custom_call.1} parent=5 // pred_region
        %s187 = ssub.s32 %s14, 1
        // Predicated region
        $region13: #{tpu_custom_call.1} parent=11 // pred_check
          %p188 = pneg %p103
        $region14: #{tpu_custom_call.1} parent=11 // pred_check_branch
          %190 = sbr.rel (%p188) target = $region16
        $region15: #{tpu_custom_call.1} parent=11 // pred_region
          _
        $region16: #{tpu_custom_call.1} parent=11 // pred_fallthru
          _
        // Predicated region
        $region17: #{tpu_custom_call.1} parent=11 // pred_check
          %p191 = pneg %p124
        $region18: #{tpu_custom_call.1} parent=11 // pred_check_branch
          %193 = sbr.rel (%p191) target = $region20
        $region19: #{tpu_custom_call.1} parent=11 // pred_region
          _
        $region20: #{tpu_custom_call.1} parent=11 // pred_fallthru
          _
        // Predicated region
        $region21: #{tpu_custom_call.1} parent=11 // pred_check
          %p194 = pneg %p145
        $region22: #{tpu_custom_call.1} parent=11 // pred_check_branch
          %196 = sbr.rel (%p194) target = $region24
        $region23: #{tpu_custom_call.1} parent=11 // pred_region
          _
        $region24: #{tpu_custom_call.1} parent=11 // pred_fallthru
          _
      $region12: #{tpu_custom_call.1} parent=5 // pred_fallthru
        _
      %p197 = scmp.lt.s32.totalorder %s14, 2
      // Predicated region
      $region25: #{tpu_custom_call.1} parent=5 // pred_check
        %p198 = pneg %p197
      $region26: #{tpu_custom_call.1} parent=5 // pred_check_branch
        %200 = sbr.rel (%p198) target = $region28
      $region27: #{tpu_custom_call.1} parent=5 // pred_region
        // Predicated region
        $region29: #{tpu_custom_call.1} parent=27 // pred_check
          %p201 = pneg %p48
        $region30: #{tpu_custom_call.1} parent=27 // pred_check_branch
          %203 = sbr.rel (%p201) target = $region32
        $region31: #{tpu_custom_call.1} parent=27 // pred_region
          %s204 = smul.u32 2, %s22
          %p205 = scmp.lt.s32.totalorder %s21, 1
          %s206 = scalar_select %p205, %s21, 1
          %p207 = scmp.lt.s32.totalorder %s204, 1
          %s208 = scalar_select %p207, %s204, 1
          %s209 = smul.addr %s206, 2
          %s210 = sadd.s32 %s208, %s209
          %s211 = smul.addr %s210, 4
          %s212 = scalar_lea.vmem %s0, %s211
          %s213 = smul.u32 2, %s22
        $region32: #{tpu_custom_call.1} parent=27 // pred_fallthru
          _
        // Predicated region
        $region33: #{tpu_custom_call.1} parent=27 // pred_check
          %p214 = pneg %p76
        $region34: #{tpu_custom_call.1} parent=27 // pred_check_branch
          %216 = sbr.rel (%p214) target = $region36
        $region35: #{tpu_custom_call.1} parent=27 // pred_region
          %s217 = smul.u32 2, %s22
          %p218 = scmp.lt.s32.totalorder %s21, 1
          %s219 = scalar_select %p218, %s21, 1
          %p220 = scmp.lt.s32.totalorder %s217, 1
          %s221 = scalar_select %p220, %s217, 1
          %s222 = smul.addr %s219, 2
          %s223 = sadd.s32 %s221, %s222
          %s224 = smul.addr %s223, 4
          %s225 = scalar_lea.vmem %s1, %s224
          %s226 = smul.u32 2, %s22
        $region36: #{tpu_custom_call.1} parent=27 // pred_fallthru
          _
      $region28: #{tpu_custom_call.1} parent=5 // pred_fallthru
        _
      %p227 = scmp.le.s32.totalorder 1, %s14
      %p228 = scmp.lt.s32.totalorder %s14, 3
      %p229 = pnand %p227, %p228
      %p230 = pneg %p229
      // Predicated region
      $region37: #{tpu_custom_call.1} parent=5 // pred_check
        _
      $region38: #{tpu_custom_call.1} parent=5 // pred_check_branch
        %232 = sbr.rel (%p229) target = $region40
      $region39: #{tpu_custom_call.1} parent=5 // pred_region
        %s233 = ssub.s32 %s14, 1
        %s234 = smul.u32 2, %s24
        %p235 = scmp.lt.s32.totalorder %s23, 1
        %s236 = scalar_select %p235, %s23, 1
        %p237 = scmp.lt.s32.totalorder %s234, 1
        %s238 = scalar_select %p237, %s234, 1
        %s239 = smul.addr %s236, 2
        %s240 = sadd.s32 %s238, %s239
        %s241 = smul.addr %s240, 4
        %s242 = scalar_lea.vmem %s0, %s241
        %p243 = pneg %p54
        %p244 = pneg %p51
        %s245 = smul.u32 2, %s24
        %p246 = scmp.lt.s32.totalorder %s23, 1
        %s247 = scalar_select %p246, %s23, 1
        %p248 = scmp.lt.s32.totalorder %s245, 1
        %s249 = scalar_select %p248, %s245, 1
        %s250 = smul.addr %s247, 2
        %s251 = sadd.s32 %s249, %s250
        %s252 = smul.addr %s251, 4
        %s253 = scalar_lea.vmem %s1, %s252
        %p254 = pneg %p82
        %p255 = pneg %p79
        %p256 = pneg %p103
        %p257 = pneg %p100
        %p258 = pneg %p124
        %p259 = pneg %p121
        %p260 = pneg %p145
        %p261 = pneg %p142
        %p262 = pneg %p173
        %p263 = pneg %p170
        %s264 = sand.u32 %s160, 1
        %s265 = scalar_lea.sflag [#allocation3], %s264
        %s266 = sand.u32 %s160, 1
        %s267 = smul.addr %s266, 8
        %s268 = scalar_lea.vmem [#allocation2], %s267
        %s269 = smul.u32 2, %s24
        %p270 = scmp.lt.s32.totalorder %s23, 1
        %s271 = scalar_select %p270, %s23, 1
        %p272 = scmp.lt.s32.totalorder %s269, 1
        %s273 = scalar_select %p272, %s269, 1
        %s274 = smul.addr %s271, 2
        %s275 = sadd.s32 %s273, %s274
        %s276 = smul.addr %s275, 4
        %s277 = scalar_lea.vmem %s0, %s276
        %s278 = smul.u32 2, %s24
        %s279 = smul.u32 2, %s24
        %p280 = scmp.lt.s32.totalorder %s23, 1
        %s281 = scalar_select %p280, %s23, 1
        %p282 = scmp.lt.s32.totalorder %s279, 1
        %s283 = scalar_select %p282, %s279, 1
        %s284 = smul.addr %s281, 2
        %s285 = sadd.s32 %s283, %s284
        %s286 = smul.addr %s285, 4
        %s287 = scalar_lea.vmem %s1, %s286
        %s288 = smul.u32 2, %s24
        %s289 = smul.u32 2, %s24
        %v290 = vld [vmem:[%s2] sm:$0xff]
        %v291 = vld [vmem:[%s2 + $0x8] sm:$0xff]
        %v292 = vld [vmem:[%s2 + $0x10] sm:$0xff]
        %v293 = vld [vmem:[%s3] sm:$0xff]
        %v294 = vld [vmem:[%s3 + $0x8] sm:$0xff]
        %v295 = vld [vmem:[%s4] sm:$0xf]
        %v296 = vld [vmem:[%s277] sm:$0xff]
        %v297 = vld [vmem:[%s287] sm:$0xff]
        %v299 = vcombine.high %v297, %v297
        %vm300 = vcmask 31744
        %v302 = vsel %vm300, %v290, 0
        %v305 = vsel %vm300, %v291, 0
        %v308 = vsel %vm300, %v292, 0
        %vm310 = vcmask 1043456
        %v311 = vsel %vm310, %v297, 0
        %v313 = vsel %vm310, %v299, 0
        %315 = vmatprep.subr.mxu0 %v313
        %316 = vmatpush1.msra.mxu0 %v311
        %317 = vmatprep.subr.mxu0 0.0
        %318 = vmatpush1.msra.mxu0 0.0
        %319 = vmatprep.subr.mxu0 0.0
        %320 = vmatpush1.msra.mxu0 0.0
        %321 = vmatprep.subr.mxu0 0.0
        %322 = vmatpush1.msra.mxu0 0.0
        %323 = vmatprep.subr.mxu0 0.0
        %324 = vmatpush1.msra.mxu0 0.0
        %325 = vmatprep.subr.mxu0 0.0
        %326 = vmatpush1.msra.mxu0 0.0
        %327 = vmatprep.subr.mxu0 0.0
        %328 = vmatpush1.msra.mxu0 0.0
        %329 = vmatprep.subr.mxu0 0.0
        %330 = vmatpush1.msra.mxu0 0.0
        %331 = vmatprep.subr.mxu0 0.0
        %332 = vmatpush1.msra.mxu0 0.0
        %333 = vmatprep.subr.mxu0 0.0
        %334 = vmatpush1.msra.mxu0 0.0
        %335 = vmatprep.subr.mxu0 0.0
        %336 = vmatpush1.msra.mxu0 0.0
        %337 = vmatprep.subr.mxu0 0.0
        %338 = vmatpush1.msra.mxu0 0.0
        %339 = vmatprep.subr.mxu0 0.0
        %340 = vmatpush1.msra.mxu0 0.0
        %341 = vmatprep.subr.mxu0 0.0
        %342 = vmatpush1.msra.mxu0 0.0
        %343 = vmatprep.subr.mxu0 0.0
        %344 = vmatpush1.msra.mxu0 0.0
        %345 = vmatprep.subr.mxu0 0.0
        %346 = vmatpush1.msra.mxu0 0.0
        %347 = vmatprep.subr.mxu0 0.0
        %348 = vmatpush1.msra.mxu0 0.0
        %349 = vmatprep.subr.mxu0 0.0
        %350 = vmatpush1.msra.mxu0 0.0
        %351 = vmatprep.subr.mxu0 0.0
        %352 = vmatpush1.msra.mxu0 0.0
        %353 = vmatprep.subr.mxu0 0.0
        %354 = vmatpush1.msra.mxu0 0.0
        %355 = vmatprep.subr.mxu0 0.0
        %356 = vmatpush1.msra.mxu0 0.0
        %357 = vmatprep.subr.mxu0 0.0
        %358 = vmatpush1.msra.mxu0 0.0
        %359 = vmatprep.subr.mxu0 0.0
        %360 = vmatpush1.msra.mxu0 0.0
        %361 = vmatprep.subr.mxu0 0.0
        %362 = vmatpush1.msra.mxu0 0.0
        %363 = vmatprep.subr.mxu0 0.0
        %364 = vmatpush1.msra.mxu0 0.0
        %365 = vmatprep.subr.mxu0 0.0
        %366 = vmatpush1.msra.mxu0 0.0
        %367 = vmatprep.subr.mxu0 0.0
        %368 = vmatpush1.msra.mxu0 0.0
        %369 = vmatprep.subr.mxu0 0.0
        %370 = vmatpush1.msra.mxu0 0.0
        %371 = vmatprep.subr.mxu0 0.0
        %372 = vmatpush1.msra.mxu0 0.0
        %373 = vmatprep.subr.mxu0 0.0
        %374 = vmatpush1.msra.mxu0 0.0
        %375 = vmatprep.subr.mxu0 0.0
        %376 = vmatpush1.msra.mxu0 0.0
        %377 = vmatprep.subr.mxu0 0.0
        %378 = vmatpush1.msra.mxu0 0.0
        %379 = vmatprep.mubr.f32.mxu0 0.0
        %380 = vmatmul.mubr.f32.gmra.mrb[0].mxu0 %v302
        %v381 = vpop.f32.mrb[0].mxu0
        %v382 = vadd.f32 0.0, %v381
        %v383 = vpop.f32.mrb[0].mxu0
        %v384 = vadd.f32 0.0, %v383
        %385 = vmatprep.mubr.f32.mxu0 0.0
        %386 = vmatmul.mubr.f32.gmra.mrb[0].mxu0 %v305
        %v387 = vpop.f32.mrb[0].mxu0
        %v388 = vadd.f32 0.0, %v387
        %v389 = vpop.f32.mrb[0].mxu0
        %v390 = vadd.f32 0.0, %v389
        %391 = vmatprep.mubr.f32.mxu0 0.0
        %392 = vmatmul.mubr.f32.gmra.mrb[0].mxu0 %v308
        %v393 = vpop.f32.mrb[0].mxu0
        %v394 = vadd.f32 0.0, %v393
        %v395 = vpop.f32.mrb[0].mxu0
        %v396 = vadd.f32 0.0, %v395
        %397 = vdwg.mxu0
        %v399 = vcombine.high %v296, %v296
        %v401 = vsel %vm300, %v293, 0
        %v404 = vsel %vm300, %v294, 0
        %v406 = vsel %vm310, %v296, 0
        %v408 = vsel %vm310, %v399, 0
        %410 = vmatprep.subr.mxu0 %v408
        %411 = vmatpush1.msra.mxu0 %v406
        %412 = vmatprep.subr.mxu0 0.0
        %413 = vmatpush1.msra.mxu0 0.0
        %414 = vmatprep.subr.mxu0 0.0
        %415 = vmatpush1.msra.mxu0 0.0
        %416 = vmatprep.subr.mxu0 0.0
        %417 = vmatpush1.msra.mxu0 0.0
        %418 = vmatprep.subr.mxu0 0.0
        %419 = vmatpush1.msra.mxu0 0.0
        %420 = vmatprep.subr.mxu0 0.0
        %421 = vmatpush1.msra.mxu0 0.0
        %422 = vmatprep.subr.mxu0 0.0
        %423 = vmatpush1.msra.mxu0 0.0
        %424 = vmatprep.subr.mxu0 0.0
        %425 = vmatpush1.msra.mxu0 0.0
        %426 = vmatprep.subr.mxu0 0.0
        %427 = vmatpush1.msra.mxu0 0.0
        %428 = vmatprep.subr.mxu0 0.0
        %429 = vmatpush1.msra.mxu0 0.0
        %430 = vmatprep.subr.mxu0 0.0
        %431 = vmatpush1.msra.mxu0 0.0
        %432 = vmatprep.subr.mxu0 0.0
        %433 = vmatpush1.msra.mxu0 0.0
        %434 = vmatprep.subr.mxu0 0.0
        %435 = vmatpush1.msra.mxu0 0.0
        %436 = vmatprep.subr.mxu0 0.0
        %437 = vmatpush1.msra.mxu0 0.0
        %438 = vmatprep.subr.mxu0 0.0
        %439 = vmatpush1.msra.mxu0 0.0
        %440 = vmatprep.subr.mxu0 0.0
        %441 = vmatpush1.msra.mxu0 0.0
        %442 = vmatprep.subr.mxu0 0.0
        %443 = vmatpush1.msra.mxu0 0.0
        %444 = vmatprep.subr.mxu0 0.0
        %445 = vmatpush1.msra.mxu0 0.0
        %446 = vmatprep.subr.mxu0 0.0
        %447 = vmatpush1.msra.mxu0 0.0
        %448 = vmatprep.subr.mxu0 0.0
        %449 = vmatpush1.msra.mxu0 0.0
        %450 = vmatprep.subr.mxu0 0.0
        %451 = vmatpush1.msra.mxu0 0.0
        %452 = vmatprep.subr.mxu0 0.0
        %453 = vmatpush1.msra.mxu0 0.0
        %454 = vmatprep.subr.mxu0 0.0
        %455 = vmatpush1.msra.mxu0 0.0
        %456 = vmatprep.subr.mxu0 0.0
        %457 = vmatpush1.msra.mxu0 0.0
        %458 = vmatprep.subr.mxu0 0.0
        %459 = vmatpush1.msra.mxu0 0.0
        %460 = vmatprep.subr.mxu0 0.0
        %461 = vmatpush1.msra.mxu0 0.0
        %462 = vmatprep.subr.mxu0 0.0
        %463 = vmatpush1.msra.mxu0 0.0
        %464 = vmatprep.subr.mxu0 0.0
        %465 = vmatpush1.msra.mxu0 0.0
        %466 = vmatprep.subr.mxu0 0.0
        %467 = vmatpush1.msra.mxu0 0.0
        %468 = vmatprep.subr.mxu0 0.0
        %469 = vmatpush1.msra.mxu0 0.0
        %470 = vmatprep.subr.mxu0 0.0
        %471 = vmatpush1.msra.mxu0 0.0
        %472 = vmatprep.subr.mxu0 0.0
        %473 = vmatpush1.msra.mxu0 0.0
        %474 = vmatprep.mubr.f32.mxu0 0.0
        %475 = vmatmul.mubr.f32.gmra.mrb[0].mxu0 %v401
        %v476 = vpop.f32.mrb[0].mxu0
        %v477 = vadd.f32 0.0, %v476
        %v478 = vpop.f32.mrb[0].mxu0
        %v479 = vadd.f32 0.0, %v478
        %480 = vmatprep.mubr.f32.mxu0 0.0
        %481 = vmatmul.mubr.f32.gmra.mrb[0].mxu0 %v404
        %v482 = vpop.f32.mrb[0].mxu0
        %v483 = vadd.f32 0.0, %v482
        %v484 = vpop.f32.mrb[0].mxu0
        %v485 = vadd.f32 0.0, %v484
        %486 = vdwg.mxu0
        %v487 = vadd.f32 %v382, %v477
        %v488 = vadd.f32 %v384, %v479
        %v489 = vxor.u32 %v487, 2147483648
        %v490 = vxor.u32 %v488, 2147483648
        %v491 = vmul.f32 %v489, 1.442695
        %v492 = vpow.pop %v491
        %v493 = vmul.f32 %v490, 1.442695
        %v494 = vpow.pop %v493
        %v495 = vadd.f32 %v492, 1.0
        %v496 = vadd.f32 %v494, 1.0
        %v497 = vrcp.pop %v495
        %v498 = vmul.f32 1.0, %v497
        %v499 = vrcp.pop %v496
        %v500 = vmul.f32 1.0, %v499
        %v501 = vadd.f32 %v388, %v483
        %v502 = vadd.f32 %v390, %v485
        %v503 = vsub.f32 %v501, 0.1
        %v504 = vsub.f32 %v502, 0.1
        %v505 = vxor.u32 %v503, 2147483648
        %v506 = vxor.u32 %v504, 2147483648
        %v507 = vmul.f32 %v505, 1.442695
        %v508 = vpow.pop %v507
        %v509 = vmul.f32 %v506, 1.442695
        %v510 = vpow.pop %v509
        %v511 = vadd.f32 %v508, 1.0
        %v512 = vadd.f32 %v510, 1.0
        %v513 = vrcp.pop %v511
        %v514 = vmul.f32 1.0, %v513
        %v515 = vrcp.pop %v512
        %v516 = vmul.f32 1.0, %v515
        %v518 = vmul.f32 %v498, %v296
        %v519 = vmul.f32 %v500, %v399
        %v521 = vsel %vm300, %v295, 0
        %v524 = vsel %vm310, %v518, 0
        %v527 = vsel %vm310, %v519, 0
        %529 = vmatprep.subr.mxu0 %v527
        %530 = vmatpush1.msra.mxu0 %v524
        %531 = vmatprep.subr.mxu0 0.0
        %532 = vmatpush1.msra.mxu0 0.0
        %533 = vmatprep.subr.mxu0 0.0
        %534 = vmatpush1.msra.mxu0 0.0
        %535 = vmatprep.subr.mxu0 0.0
        %536 = vmatpush1.msra.mxu0 0.0
        %537 = vmatprep.subr.mxu0 0.0
        %538 = vmatpush1.msra.mxu0 0.0
        %539 = vmatprep.subr.mxu0 0.0
        %540 = vmatpush1.msra.mxu0 0.0
        %541 = vmatprep.subr.mxu0 0.0
        %542 = vmatpush1.msra.mxu0 0.0
        %543 = vmatprep.subr.mxu0 0.0
        %544 = vmatpush1.msra.mxu0 0.0
        %545 = vmatprep.subr.mxu0 0.0
        %546 = vmatpush1.msra.mxu0 0.0
        %547 = vmatprep.subr.mxu0 0.0
        %548 = vmatpush1.msra.mxu0 0.0
        %549 = vmatprep.subr.mxu0 0.0
        %550 = vmatpush1.msra.mxu0 0.0
        %551 = vmatprep.subr.mxu0 0.0
        %552 = vmatpush1.msra.mxu0 0.0
        %553 = vmatprep.subr.mxu0 0.0
        %554 = vmatpush1.msra.mxu0 0.0
        %555 = vmatprep.subr.mxu0 0.0
        %556 = vmatpush1.msra.mxu0 0.0
        %557 = vmatprep.subr.mxu0 0.0
        %558 = vmatpush1.msra.mxu0 0.0
        %559 = vmatprep.subr.mxu0 0.0
        %560 = vmatpush1.msra.mxu0 0.0
        %561 = vmatprep.subr.mxu0 0.0
        %562 = vmatpush1.msra.mxu0 0.0
        %563 = vmatprep.subr.mxu0 0.0
        %564 = vmatpush1.msra.mxu0 0.0
        %565 = vmatprep.subr.mxu0 0.0
        %566 = vmatpush1.msra.mxu0 0.0
        %567 = vmatprep.subr.mxu0 0.0
        %568 = vmatpush1.msra.mxu0 0.0
        %569 = vmatprep.subr.mxu0 0.0
        %570 = vmatpush1.msra.mxu0 0.0
        %571 = vmatprep.subr.mxu0 0.0
        %572 = vmatpush1.msra.mxu0 0.0
        %573 = vmatprep.subr.mxu0 0.0
        %574 = vmatpush1.msra.mxu0 0.0
        %575 = vmatprep.subr.mxu0 0.0
        %576 = vmatpush1.msra.mxu0 0.0
        %577 = vmatprep.subr.mxu0 0.0
        %578 = vmatpush1.msra.mxu0 0.0
        %579 = vmatprep.subr.mxu0 0.0
        %580 = vmatpush1.msra.mxu0 0.0
        %581 = vmatprep.subr.mxu0 0.0
        %582 = vmatpush1.msra.mxu0 0.0
        %583 = vmatprep.subr.mxu0 0.0
        %584 = vmatpush1.msra.mxu0 0.0
        %585 = vmatprep.subr.mxu0 0.0
        %586 = vmatpush1.msra.mxu0 0.0
        %587 = vmatprep.subr.mxu0 0.0
        %588 = vmatpush1.msra.mxu0 0.0
        %589 = vmatprep.subr.mxu0 0.0
        %590 = vmatpush1.msra.mxu0 0.0
        %591 = vmatprep.subr.mxu0 0.0
        %592 = vmatpush1.msra.mxu0 0.0
        %593 = vmatprep.mubr.f32.mxu0 0.0
        %594 = vmatmul.mubr.f32.gmra.mrb[0].mxu0 %v521
        %v595 = vpop.f32.mrb[0].mxu0
        %v596 = vadd.f32 0.0, %v595
        %v597 = vpop.f32.mrb[0].mxu0
        %v598 = vadd.f32 0.0, %v597
        %599 = vdwg.mxu0
        %v600 = vadd.f32 %v394, %v596
        %v601 = vadd.f32 %v396, %v598
        %v602 = vtanh.pop %v600
        %v603 = vtanh.pop %v601
        %v604 = vsub.f32 %v602, %v296
        %v605 = vsub.f32 %v603, %v399
        %v606 = vmul.f32 %v514, %v604
        %v607 = vmul.f32 %v516, %v605
        %v610 = vcombine.low %v606, %v607
        %v612 = vadd.f32 %v296, %v610
        %613 = vst [vmem:[%s268] sm:$0xff] %v612
        %s614 = sand.u32 %s160, 1
        %s615 = scalar_lea.sflag [#allocation3], %s614
        %s616 = sand.u32 %s160, 1
        %s617 = smul.addr %s616, 8
        %s618 = scalar_lea.vmem [#allocation2], %s617
        // Predicated region
        $region41: #{tpu_custom_call.1} parent=39 // pred_check
          %p619 = pneg %p170
        $region42: #{tpu_custom_call.1} parent=39 // pred_check_branch
          %621 = sbr.rel (%p619) target = $region44
        $region43: #{tpu_custom_call.1} parent=39 // pred_region
          %s622 = smul.u32 2, %s24
          %s624 = ssub.s32 128, 128
          %625 = vsyncadd %s615, %s624
          %s626 = smul.addr %s23, 2
          %s627 = sadd.s32 %s622, %s626
          %s628 = smul.addr %s627, 64
          %s629 = scalar_lea.hbm %s5, %s628
          %s631 = sshll.u32 %s618, 4
          %s632 = int_to_ptr.vmem [resolvable:$true] %s631
          %634 = dma.vmem_to_hbm [thread:$0]  %s632, 128, %s629, %s615
        $region44: #{tpu_custom_call.1} parent=39 // pred_fallthru
          _
      $region40: #{tpu_custom_call.1} parent=5 // pred_fallthru
        _
      %p635 = scmp.le.s32.totalorder 2, %s14
      // Predicated region
      $region45: #{tpu_custom_call.1} parent=5 // pred_check
        %p636 = pneg %p635
      $region46: #{tpu_custom_call.1} parent=5 // pred_check_branch
        %638 = sbr.rel (%p636) target = $region48
      $region47: #{tpu_custom_call.1} parent=5 // pred_region
        %s639 = ssub.s32 %s14, 2
        // Predicated region
        $region49: #{tpu_custom_call.1} parent=47 // pred_check
          %p640 = pneg %p176
        $region50: #{tpu_custom_call.1} parent=47 // pred_check_branch
          %642 = sbr.rel (%p640) target = $region52
        $region51: #{tpu_custom_call.1} parent=47 // pred_region
          %s643 = sand.u32 %s161, 1
          %s644 = scalar_lea.sflag [#allocation3], %s643
          %s645 = sand.u32 %s161, 1
          %s646 = smul.addr %s645, 8
          %s647 = scalar_lea.vmem [#allocation2], %s646
          %648 = dma.done %s644, 128
        $region52: #{tpu_custom_call.1} parent=47 // pred_fallthru
          _
      $region48: #{tpu_custom_call.1} parent=5 // pred_fallthru
        _
    $region6: #{tpu_custom_call.1} parent=1 // loop_footer
      %s18 = sadd.s32 1, %s14
    $region7: #{tpu_custom_call.1} parent=1 // loop_footer_branch
      %13 = sbr.rel target = $region3
    $region8: #{tpu_custom_call.1} parent=1 // loop_exit
      _
    %649 = vsyncpa [#allocation3], 1
    %s650 = scalar_lea.sflag [#allocation3], 1
    %651 = vsyncpa %s650, 1

</llo_original>
